<compile_context>
chip_gen: v6e
topology: v6e:2x2x1
jax: 0.10.0
libtpu: 0.0.40
codegen_flags: <defaults>
</compile_context>

<pallas_src>
import math
from dataclasses import dataclass
from functools import partial

import jax
import jax.numpy as jnp
from jax import lax
from jax.experimental import pallas as pl
from jax.experimental.pallas import tpu as pltpu


@dataclass(frozen=True)
class Config:
    vocab_size: int = 64
    block_size: int = 16
    n_layer: int = 2
    n_head: int = 2
    n_embd: int = 32
    dropout: float = 0.0   # dropout is a no-op in this inference forward
    bias: bool = False


_EPS = 1e-5


# ----------------------------- in-kernel helpers -----------------------------

def _layernorm(x, g):
    mu = jnp.mean(x, axis=-1, keepdims=True)
    xc = x - mu
    var = jnp.mean(xc * xc, axis=-1, keepdims=True)
    return xc * lax.rsqrt(var + 1e-5) * g


def _act_quant_dequant(x):
    # BitActivationQuant: 8-bit absmax per-row quant-dequant.  Elementwise math
    # kept in f32 (v5e VPU/EUP have no bf16 path).  With absmax scaling the
    # clamp to [-128,127] can never fire, so it is dropped (review item).
    a = jnp.maximum(jnp.max(jnp.abs(x), axis=-1, keepdims=True), _EPS)
    return jnp.round(x * (127.0 / a)) * (a * (1.0 / 127.0))


def _act_quant_int(x):
    # Integer-valued (f32) quantized activations + per-row dequant factor so
    # that x_dq = x_int * factor.
    a = jnp.maximum(jnp.max(jnp.abs(x), axis=-1, keepdims=True), _EPS)
    return jnp.round(x * (127.0 / a)), a * (1.0 / 127.0)


def _bitlinear(x, w_tern, sw):
    # BitNet b1.58 linear: pre-quantized ternary weight ({-1,0,1} bf16, already
    # transposed to (in,out)) and per-tensor scalar scale sw (read from SMEM).
    # Integer-valued bf16 activations x ternary bf16 weights on the MXU with
    # f32 accumulation is exact (|values| <= 127 < 2^8), and the full dequant
    # collapses into ONE fused epilogue multiply: y * (row_scale * sw).
    x_int, x_dq = _act_quant_int(x)
    y = jnp.dot(x_int.astype(jnp.bfloat16), w_tern,
                preferred_element_type=jnp.float32)
    return y * (x_dq * sw)


# ------------------------- fully fused forward kernel -------------------------

def _fused_forward_kernel(scales_ref, idx_ref, wte_ref, wpe_ref, ln1_ref,
                          ln2_ref, lnf_ref, wattn_ref, wcproj_ref, wfc_ref,
                          wmproj_ref, headw_ref, logits_ref,
                          *, T, nh, hd, C, L, V):
    # One grid step == one batch element: embeddings -> L blocks -> head.
    # Everything stays in VMEM/vregs; only the (1,1,V) logits go back to HBM.

    # --- embeddings: exact one-hot gather on the MXU + pos emb + emb quant ---
    idx = idx_ref[...]                                          # (T, 1) int32
    tok_oh = jnp.where(
        lax.broadcasted_iota(jnp.int32, (T, V), 1) == idx, 1.0, 0.0)
    tok_emb = jnp.dot(tok_oh, wte_ref[...], preferred_element_type=jnp.float32)
    x = _act_quant_dequant(tok_emb + wpe_ref[0:T, :])           # dropout p=0: no-op

    sm_scale = 1.0 / math.sqrt(hd)
    rows = lax.broadcasted_iota(jnp.int32, (T, T), 0)
    cols = lax.broadcasted_iota(jnp.int32, (T, T), 1)
    causal = cols <= rows

    for l in range(L):                                          # static unroll (L=2)
        s_attn = scales_ref[4 * l + 0]
        s_cproj = scales_ref[4 * l + 1]
        s_fc = scales_ref[4 * l + 2]
        s_mproj = scales_ref[4 * l + 3]
        w_attn = wattn_ref[l]                                   # (C, 3C) ternary bf16
        w_cproj = wcproj_ref[l]                                 # (C, C)
        w_fc = wfc_ref[l]                                       # (C, 4C)
        w_mproj = wmproj_ref[l]                                 # (4C, C)

        # ---- attention branch: x + c_proj(causal-SDPA(qkv(LN(x)))) ----
        # TODO(synk): GainCellAttention source was not provided; implemented as
        # standard causal softmax attention over BitLinear-projected q/k/v.
        h = _layernorm(x, ln1_ref[l])
        qkv = _bitlinear(h, w_attn, s_attn)                     # (T, 3C) f32

        y_heads = []
        for hh in range(nh):                                    # nh=2, static
            c0 = hh * hd
            q = qkv[:, c0:c0 + hd].astype(jnp.bfloat16)
            k = qkv[:, C + c0:C + c0 + hd].astype(jnp.bfloat16)
            v = qkv[:, 2 * C + c0:2 * C + c0 + hd].astype(jnp.bfloat16)
            s = lax.dot_general(q, k, (((1,), (1,)), ((), ())),
                                preferred_element_type=jnp.float32) * sm_scale
            s = jnp.where(causal, s, -jnp.inf)
            p = jnp.exp(s - jnp.max(s, axis=-1, keepdims=True))
            att = p * pl.reciprocal(jnp.sum(p, axis=-1, keepdims=True),
                                    approx=True)                # EUP, off VPU path
            y_heads.append(jnp.dot(att.astype(jnp.bfloat16), v,
                                   preferred_element_type=jnp.float32))  # (T, hd)

        # BitLinear c_proj: quantize the (virtual) head-concat per row, then
        # accumulate per-head partial matmuls against sublane row-blocks of
        # w_cproj -- no lane-offset concatenation, no masked scratch stores.
        amax = _EPS
        for yh in y_heads:
            amax = jnp.maximum(amax, jnp.max(jnp.abs(yh), axis=-1, keepdims=True))
        qs = 127.0 / amax
        acc = None
        for hh, yh in enumerate(y_heads):
            xi = jnp.round(yh * qs).astype(jnp.bfloat16)
            part = jnp.dot(xi, w_cproj[hh * hd:(hh + 1) * hd, :],
                           preferred_element_type=jnp.float32)
            acc = part if acc is None else acc + part
        x = x + acc * ((amax * (1.0 / 127.0)) * s_cproj)        # residual add

        # ---- MLP branch: x + q(BitLin2(q(relu(BitLin1(LN(x)))))) ----
        h = _layernorm(x, ln2_ref[l])
        h = _bitlinear(h, w_fc, s_fc)
        h = jnp.maximum(h, 0.0)
        h = _act_quant_dequant(h)
        h = _bitlinear(h, w_mproj, s_mproj)
        h = _act_quant_dequant(h)                               # dropout p=0: no-op
        x = x + h

    # ---- tail: last token -> ln_f -> head_act_quant -> tied lm_head ----
    # ln_f / act-quant are per-token, so applying them to the last-token row
    # only is equivalent to the reference (ln_f -> quant -> slice -> head).
    xl = x[T - 1:T, :]                                          # (1, C)
    hl = _act_quant_dequant(_layernorm(xl, lnf_ref[...]))
    # lm_head is the one full-precision (weight-tied) matmul in the reference;
    # kept f32 for fidelity (it is (1,C)x(C,V) -- negligible at this size).
    logits = jnp.dot(hl, headw_ref[...], preferred_element_type=jnp.float32)
    logits_ref[...] = logits[None]                              # (1, 1, V)


# -------------------------------- parameters --------------------------------

def init_params(key, cfg: Config):
    # Matches the PyTorch init: N(0, 0.02) for linear/embedding weights,
    # mlp down-projection re-initialized to N(0, 0.02/sqrt(2*n_layer));
    # wte is tied to lm_head.weight (same array).
    C, V, L = cfg.n_embd, cfg.vocab_size, cfg.n_layer
    keys = jax.random.split(key, 2 + 4 * L)
    std = 0.02
    proj_std = 0.02 / math.sqrt(2 * L)
    params = {
        "wte": std * jax.random.normal(keys[0], (V, C), jnp.float32),
        "wpe": std * jax.random.normal(keys[1], (cfg.block_size, C), jnp.float32),
        "ln_f": jnp.ones((C,), jnp.float32),
        "blocks": [],
    }
    for l in range(L):
        k = keys[2 + 4 * l: 2 + 4 * (l + 1)]
        params["blocks"].append({
            "ln_1": jnp.ones((C,), jnp.float32),
            "c_attn": std * jax.random.normal(k[0], (3 * C, C), jnp.float32),
            "c_proj": std * jax.random.normal(k[1], (C, C), jnp.float32),
            "ln_2": jnp.ones((C,), jnp.float32),
            "mlp_fc": std * jax.random.normal(k[2], (4 * C, C), jnp.float32),
            "mlp_proj": proj_std * jax.random.normal(k[3], (C, 4 * C), jnp.float32),
        })
    return params


def _prep_bitlinear_weight(w):
    # BitNet b1.58 per-tensor ternary quantization, done ONCE at prep time.
    # w: (out, in) f32 (PyTorch layout).  Returns ((in,out) ternary bf16, scalar scale).
    gamma = jnp.maximum(jnp.mean(jnp.abs(w)), _EPS)
    tern = jnp.clip(jnp.round(w / gamma), -1.0, 1.0)
    return tern.T.astype(jnp.bfloat16), gamma.astype(jnp.float32)


def prepare_params(params, cfg: Config):
    # One-time weight quantization / transposition / stacking (out of hot path).
    C = cfg.n_embd
    wa, wc, wf, wm, scales, ln1, ln2 = [], [], [], [], [], [], []
    for blk in params["blocks"]:
        a_w, a_s = _prep_bitlinear_weight(blk["c_attn"])
        c_w, c_s = _prep_bitlinear_weight(blk["c_proj"])
        f_w, f_s = _prep_bitlinear_weight(blk["mlp_fc"])
        m_w, m_s = _prep_bitlinear_weight(blk["mlp_proj"])
        wa.append(a_w); wc.append(c_w); wf.append(f_w); wm.append(m_w)
        scales += [a_s, c_s, f_s, m_s]
        ln1.append(blk["ln_1"].reshape(1, C))
        ln2.append(blk["ln_2"].reshape(1, C))
    return {
        "wte": params["wte"],                    # (V, C) f32
        "wpe": params["wpe"],                    # (block_size, C) f32
        "ln1": jnp.stack(ln1),                   # (L, 1, C) f32
        "ln2": jnp.stack(ln2),                   # (L, 1, C) f32
        "ln_f": params["ln_f"].reshape(1, C),
        "w_attn": jnp.stack(wa),                 # (L, C, 3C) ternary bf16
        "w_cproj": jnp.stack(wc),                # (L, C, C)
        "w_fc": jnp.stack(wf),                   # (L, C, 4C)
        "w_mproj": jnp.stack(wm),                # (L, 4C, C)
        "lm_head_t": params["wte"].T,            # tied lm_head weight, (C, V) f32
        "scales": jnp.stack(scales),             # (4L,) f32 -> SMEM
    }


# ---------------------------------- forward ----------------------------------

def forward(prep, idx, cfg: Config):
    B, T = idx.shape
    C, nh, L, V = cfg.n_embd, cfg.n_head, cfg.n_layer, cfg.vocab_size
    hd = C // nh
    P = prep["wpe"].shape[0]
    assert T % 8 == 0, "token block must be sublane-aligned at this toy config"
    idx2d = idx.reshape(B * T, 1).astype(jnp.int32)

    kernel = partial(_fused_forward_kernel, T=T, nh=nh, hd=hd, C=C, L=L, V=V)
    grid_spec = pltpu.PrefetchScalarGridSpec(
        num_scalar_prefetch=0,
        grid=(B,),                                               # one batch / step
        in_specs=[
            pl.BlockSpec(memory_space=pltpu.MemorySpace.SMEM),   # weight scales
            pl.BlockSpec((T, 1), lambda b: (b, 0)),              # idx of batch b
            pl.BlockSpec((V, C), lambda b: (0, 0)),              # wte (resident)
            pl.BlockSpec((P, C), lambda b: (0, 0)),              # wpe (resident)
            pl.BlockSpec((L, 1, C), lambda b: (0, 0, 0)),        # ln_1 gains
            pl.BlockSpec((L, 1, C), lambda b: (0, 0, 0)),        # ln_2 gains
            pl.BlockSpec((1, C), lambda b: (0, 0)),              # ln_f gain
            pl.BlockSpec((L, C, 3 * C), lambda b: (0, 0, 0)),    # ternary qkv w
            pl.BlockSpec((L, C, C), lambda b: (0, 0, 0)),        # ternary c_proj w
            pl.BlockSpec((L, C, 4 * C), lambda b: (0, 0, 0)),    # ternary mlp fc w
            pl.BlockSpec((L, 4 * C, C), lambda b: (0, 0, 0)),    # ternary mlp proj w
            pl.BlockSpec((C, V), lambda b: (0, 0)),              # tied lm_head (f32)
        ],
        out_specs=pl.BlockSpec((1, 1, V), lambda b: (b, 0, 0)),
    )
    return pl.pallas_call(
        kernel,
        grid_spec=grid_spec,
        out_shape=jax.ShapeDtypeStruct((B, 1, V), jnp.float32),
        compiler_params=pltpu.CompilerParams(
            dimension_semantics=("parallel",)),   # uses v7x's 2nd TC; harmless on v5e/v6e
    )(prep["scales"], idx2d, prep["wte"], prep["wpe"], prep["ln1"], prep["ln2"],
      prep["ln_f"], prep["w_attn"], prep["w_cproj"], prep["w_fc"],
      prep["w_mproj"], prep["lm_head_t"])


if __name__ == "__main__":
    cfg = Config()
    key = jax.random.PRNGKey(0)
    pkey, ikey = jax.random.split(key)
    params = init_params(pkey, cfg)
    prep = prepare_params(params, cfg)            # one-time ternary weight quant

    B, T = 2, 8
    idx = jax.random.randint(ikey, (B, T), 0, cfg.vocab_size, dtype=jnp.int32)

    fwd = jax.jit(forward, static_argnums=(2,))
    logits = jax.block_until_ready(fwd(prep, idx, cfg))

    assert logits.shape == (B, 1, cfg.vocab_size), logits.shape
    assert bool(jnp.all(jnp.isfinite(logits)))
    print("KERNEL_OK")
</pallas_src>

<mosaic_0001>
module attributes {stable_mosaic.version = 11 : i64} {
  func.func @_fused_forward_kernel(%arg0: i32, %arg1: memref<8xf32, #tpu.memory_space<smem>>, %arg2: memref<8x1xi32, #tpu.memory_space<vmem>>, %arg3: memref<64x32xf32, #tpu.memory_space<vmem>>, %arg4: memref<16x32xf32, #tpu.memory_space<vmem>>, %arg5: memref<2x1x32xf32, #tpu.memory_space<vmem>>, %arg6: memref<2x1x32xf32, #tpu.memory_space<vmem>>, %arg7: memref<1x32xf32, #tpu.memory_space<vmem>>, %arg8: memref<2x32x96xbf16, #tpu.memory_space<vmem>>, %arg9: memref<2x32x32xbf16, #tpu.memory_space<vmem>>, %arg10: memref<2x32x128xbf16, #tpu.memory_space<vmem>>, %arg11: memref<2x128x32xbf16, #tpu.memory_space<vmem>>, %arg12: memref<32x64xf32, #tpu.memory_space<vmem>>, %arg13: memref<1x1x64xf32, #tpu.memory_space<vmem>>) attributes {dimension_semantics = [#tpu.dimension_semantics<parallel>], iteration_bounds = array<i64: 2>, scalar_prefetch = 0 : i64, scratch_operands = 0 : i64, tpu.core_type = #tpu.core_type<tc>, window_params = [{transform_indices = @transform_0, window_bounds = array<i64: 8>}, {transform_indices = @transform_1, window_bounds = array<i64: 8, 1>}, {pipeline_mode = #tpu.pipeline_mode<synchronous>, transform_indices = @transform_2, window_bounds = array<i64: 64, 32>}, {pipeline_mode = #tpu.pipeline_mode<synchronous>, transform_indices = @transform_3, window_bounds = array<i64: 16, 32>}, {pipeline_mode = #tpu.pipeline_mode<synchronous>, transform_indices = @transform_4, window_bounds = array<i64: 2, 1, 32>}, {pipeline_mode = #tpu.pipeline_mode<synchronous>, transform_indices = @transform_5, window_bounds = array<i64: 2, 1, 32>}, {pipeline_mode = #tpu.pipeline_mode<synchronous>, transform_indices = @transform_6, window_bounds = array<i64: 1, 32>}, {pipeline_mode = #tpu.pipeline_mode<synchronous>, transform_indices = @transform_7, window_bounds = array<i64: 2, 32, 96>}, {pipeline_mode = #tpu.pipeline_mode<synchronous>, transform_indices = @transform_8, window_bounds = array<i64: 2, 32, 32>}, {pipeline_mode = #tpu.pipeline_mode<synchronous>, transform_indices = @transform_9, window_bounds = array<i64: 2, 32, 128>}, {pipeline_mode = #tpu.pipeline_mode<synchronous>, transform_indices = @transform_10, window_bounds = array<i64: 2, 128, 32>}, {pipeline_mode = #tpu.pipeline_mode<synchronous>, transform_indices = @transform_11, window_bounds = array<i64: 32, 64>}, {transform_indices = @transform_12, window_bounds = array<i64: 1, 1, 64>}]} {
    %c0 = arith.constant 0 : index
    %c0_0 = arith.constant 0 : index
    %0 = vector.load %arg2[%c0, %c0_0] : memref<8x1xi32, #tpu.memory_space<vmem>>, vector<8x1xi32>
    %1 = tpu.iota {dimensions = array<i32: 1>} : vector<8x64xi32>
    %2 = vector.broadcast %0 : vector<8x1xi32> to vector<8x64xi32>
    %3 = arith.cmpi eq, %1, %2 : vector<8x64xi32>
    %cst = arith.constant 1.000000e+00 : f32
    %cst_1 = arith.constant 0.000000e+00 : f32
    %4 = vector.broadcast %cst : f32 to vector<8x64xf32>
    %5 = vector.broadcast %cst_1 : f32 to vector<8x64xf32>
    %6 = arith.select %3, %4, %5 : vector<8x64xi1>, vector<8x64xf32>
    %c0_2 = arith.constant 0 : index
    %c0_3 = arith.constant 0 : index
    %7 = vector.load %arg3[%c0_2, %c0_3] : memref<64x32xf32, #tpu.memory_space<vmem>>, vector<64x32xf32>
    %cst_4 = arith.constant dense<0.000000e+00> : vector<8x32xf32>
    %8 = tpu.matmul %6, %7, %cst_4 {dimension_numbers = #tpu.dot_dimension_numbers<[1], [0], [0], [1], [0, 0, 1, 1], [], []>} : vector<8x64xf32>, vector<64x32xf32>, vector<8x32xf32> -> vector<8x32xf32>
    %c0_5 = arith.constant 0 : index
    %c0_6 = arith.constant 0 : index
    %9 = vector.load %arg4[%c0_5, %c0_6] : memref<16x32xf32, #tpu.memory_space<vmem>>, vector<8x32xf32>
    %10 = arith.addf %8, %9 : vector<8x32xf32>
    %11 = math.absf %10 : vector<8x32xf32>
    %cst_7 = arith.constant dense<0xFF800000> : vector<8xf32>
    %12 = vector.multi_reduction <maximumf>, %11, %cst_7 [1] : vector<8x32xf32> to vector<8xf32>
    %13 = vector.shape_cast %12 : vector<8xf32> to vector<8x1xf32>
    %cst_8 = arith.constant 9.99999974E-6 : f32
    %14 = vector.broadcast %cst_8 : f32 to vector<8x1xf32>
    %15 = arith.maximumf %13, %14 : vector<8x1xf32>
    %cst_9 = arith.constant 1.270000e+02 : f32
    %16 = vector.broadcast %cst_9 : f32 to vector<8x1xf32>
    %17 = arith.divf %16, %15 : vector<8x1xf32>
    %18 = vector.broadcast %17 : vector<8x1xf32> to vector<8x32xf32>
    %19 = arith.mulf %10, %18 : vector<8x32xf32>
    %20 = math.roundeven %19 : vector<8x32xf32>
    %cst_10 = arith.constant 0.00787401571 : f32
    %21 = vector.broadcast %cst_10 : f32 to vector<8x1xf32>
    %22 = arith.mulf %15, %21 : vector<8x1xf32>
    %23 = vector.broadcast %22 : vector<8x1xf32> to vector<8x32xf32>
    %24 = arith.mulf %20, %23 : vector<8x32xf32>
    %25 = tpu.iota {dimensions = array<i32: 0>} : vector<8x8xi32>
    %26 = tpu.iota {dimensions = array<i32: 1>} : vector<8x8xi32>
    %27 = arith.cmpi sle, %26, %25 : vector<8x8xi32>
    %c0_11 = arith.constant 0 : index
    %28 = memref.load %arg1[%c0_11] : memref<8xf32, #tpu.memory_space<smem>>
    %c1 = arith.constant 1 : index
    %29 = memref.load %arg1[%c1] : memref<8xf32, #tpu.memory_space<smem>>
    %c2 = arith.constant 2 : index
    %30 = memref.load %arg1[%c2] : memref<8xf32, #tpu.memory_space<smem>>
    %c3 = arith.constant 3 : index
    %31 = memref.load %arg1[%c3] : memref<8xf32, #tpu.memory_space<smem>>
    %c0_12 = arith.constant 0 : index
    %c0_13 = arith.constant 0 : index
    %c0_14 = arith.constant 0 : index
    %32 = vector.load %arg8[%c0_12, %c0_13, %c0_14] : memref<2x32x96xbf16, #tpu.memory_space<vmem>>, vector<1x32x96xbf16>
    %33 = vector.shape_cast %32 : vector<1x32x96xbf16> to vector<32x96xbf16>
    %c0_15 = arith.constant 0 : index
    %c0_16 = arith.constant 0 : index
    %c0_17 = arith.constant 0 : index
    %34 = vector.load %arg9[%c0_15, %c0_16, %c0_17] : memref<2x32x32xbf16, #tpu.memory_space<vmem>>, vector<1x32x32xbf16>
    %35 = vector.shape_cast %34 : vector<1x32x32xbf16> to vector<32x32xbf16>
    %c0_18 = arith.constant 0 : index
    %c0_19 = arith.constant 0 : index
    %c0_20 = arith.constant 0 : index
    %36 = vector.load %arg10[%c0_18, %c0_19, %c0_20] : memref<2x32x128xbf16, #tpu.memory_space<vmem>>, vector<1x32x128xbf16>
    %37 = vector.shape_cast %36 : vector<1x32x128xbf16> to vector<32x128xbf16>
    %c0_21 = arith.constant 0 : index
    %c0_22 = arith.constant 0 : index
    %c0_23 = arith.constant 0 : index
    %38 = vector.load %arg11[%c0_21, %c0_22, %c0_23] : memref<2x128x32xbf16, #tpu.memory_space<vmem>>, vector<1x128x32xbf16>
    %39 = vector.shape_cast %38 : vector<1x128x32xbf16> to vector<128x32xbf16>
    %c0_24 = arith.constant 0 : index
    %c0_25 = arith.constant 0 : index
    %c0_26 = arith.constant 0 : index
    %40 = vector.load %arg5[%c0_24, %c0_25, %c0_26] : memref<2x1x32xf32, #tpu.memory_space<vmem>>, vector<1x1x32xf32>
    %41 = vector.shape_cast %40 : vector<1x1x32xf32> to vector<1x32xf32>
    %cst_27 = arith.constant dense<0.000000e+00> : vector<8xf32>
    %42 = vector.multi_reduction <add>, %24, %cst_27 [1] : vector<8x32xf32> to vector<8xf32>
    %43 = vector.shape_cast %42 : vector<8xf32> to vector<8x1xf32>
    %cst_28 = arith.constant 3.200000e+01 : f32
    %44 = vector.broadcast %cst_28 : f32 to vector<8x1xf32>
    %45 = arith.divf %43, %44 : vector<8x1xf32>
    %46 = vector.broadcast %45 : vector<8x1xf32> to vector<8x32xf32>
    %47 = arith.subf %24, %46 : vector<8x32xf32>
    %48 = arith.mulf %47, %47 : vector<8x32xf32>
    %cst_29 = arith.constant dense<0.000000e+00> : vector<8xf32>
    %49 = vector.multi_reduction <add>, %48, %cst_29 [1] : vector<8x32xf32> to vector<8xf32>
    %50 = vector.shape_cast %49 : vector<8xf32> to vector<8x1xf32>
    %cst_30 = arith.constant 3.200000e+01 : f32
    %51 = vector.broadcast %cst_30 : f32 to vector<8x1xf32>
    %52 = arith.divf %50, %51 : vector<8x1xf32>
    %cst_31 = arith.constant 9.99999974E-6 : f32
    %53 = vector.broadcast %cst_31 : f32 to vector<8x1xf32>
    %54 = arith.addf %52, %53 : vector<8x1xf32>
    %55 = math.rsqrt %54 : vector<8x1xf32>
    %56 = vector.broadcast %55 : vector<8x1xf32> to vector<8x32xf32>
    %57 = arith.mulf %47, %56 : vector<8x32xf32>
    %58 = vector.broadcast %41 : vector<1x32xf32> to vector<8x32xf32>
    %59 = arith.mulf %57, %58 : vector<8x32xf32>
    %60 = math.absf %59 : vector<8x32xf32>
    %cst_32 = arith.constant dense<0xFF800000> : vector<8xf32>
    %61 = vector.multi_reduction <maximumf>, %60, %cst_32 [1] : vector<8x32xf32> to vector<8xf32>
    %62 = vector.shape_cast %61 : vector<8xf32> to vector<8x1xf32>
    %cst_33 = arith.constant 9.99999974E-6 : f32
    %63 = vector.broadcast %cst_33 : f32 to vector<8x1xf32>
    %64 = arith.maximumf %62, %63 : vector<8x1xf32>
    %cst_34 = arith.constant 1.270000e+02 : f32
    %65 = vector.broadcast %cst_34 : f32 to vector<8x1xf32>
    %66 = arith.divf %65, %64 : vector<8x1xf32>
    %67 = vector.broadcast %66 : vector<8x1xf32> to vector<8x32xf32>
    %68 = arith.mulf %59, %67 : vector<8x32xf32>
    %69 = math.roundeven %68 : vector<8x32xf32>
    %cst_35 = arith.constant 0.00787401571 : f32
    %70 = vector.broadcast %cst_35 : f32 to vector<8x1xf32>
    %71 = arith.mulf %64, %70 : vector<8x1xf32>
    %72 = arith.truncf %69 : vector<8x32xf32> to vector<8x32xbf16>
    %cst_36 = arith.constant dense<0.000000e+00> : vector<8x96xf32>
    %73 = tpu.matmul %72, %33, %cst_36 {dimension_numbers = #tpu.dot_dimension_numbers<[1], [0], [0], [1], [0, 0, 1, 1], [], []>} : vector<8x32xbf16>, vector<32x96xbf16>, vector<8x96xf32> -> vector<8x96xf32>
    %74 = vector.broadcast %28 : f32 to vector<8x1xf32>
    %75 = arith.mulf %71, %74 : vector<8x1xf32>
    %76 = vector.broadcast %75 : vector<8x1xf32> to vector<8x96xf32>
    %77 = arith.mulf %73, %76 : vector<8x96xf32>
    %78 = vector.extract_strided_slice %77 {offsets = [0, 0], sizes = [8, 16], strides = [1, 1]} : vector<8x96xf32> to vector<8x16xf32>
    %79 = arith.truncf %78 : vector<8x16xf32> to vector<8x16xbf16>
    %80 = vector.extract_strided_slice %77 {offsets = [0, 32], sizes = [8, 16], strides = [1, 1]} : vector<8x96xf32> to vector<8x16xf32>
    %81 = arith.truncf %80 : vector<8x16xf32> to vector<8x16xbf16>
    %82 = vector.extract_strided_slice %77 {offsets = [0, 64], sizes = [8, 16], strides = [1, 1]} : vector<8x96xf32> to vector<8x16xf32>
    %83 = arith.truncf %82 : vector<8x16xf32> to vector<8x16xbf16>
    %cst_37 = arith.constant dense<0.000000e+00> : vector<8x8xf32>
    %84 = tpu.matmul %79, %81, %cst_37 {dimension_numbers = #tpu.dot_dimension_numbers<[1], [1], [0], [0], [0, 0, 1, 0], [], []>} : vector<8x16xbf16>, vector<8x16xbf16>, vector<8x8xf32> -> vector<8x8xf32>
    %cst_38 = arith.constant 2.500000e-01 : f32
    %85 = vector.broadcast %cst_38 : f32 to vector<8x8xf32>
    %86 = arith.mulf %84, %85 : vector<8x8xf32>
    %cst_39 = arith.constant 0xFF800000 : f32
    %87 = vector.broadcast %cst_39 : f32 to vector<8x8xf32>
    %88 = arith.select %27, %86, %87 : vector<8x8xi1>, vector<8x8xf32>
    %cst_40 = arith.constant dense<0xFF800000> : vector<8xf32>
    %89 = vector.multi_reduction <maximumf>, %88, %cst_40 [1] : vector<8x8xf32> to vector<8xf32>
    %90 = vector.shape_cast %89 : vector<8xf32> to vector<8x1xf32>
    %91 = vector.broadcast %90 : vector<8x1xf32> to vector<8x8xf32>
    %92 = arith.subf %88, %91 : vector<8x8xf32>
    %93 = math.exp %92 : vector<8x8xf32>
    %cst_41 = arith.constant dense<0.000000e+00> : vector<8xf32>
    %94 = vector.multi_reduction <add>, %93, %cst_41 [1] : vector<8x8xf32> to vector<8xf32>
    %95 = vector.shape_cast %94 : vector<8xf32> to vector<8x1xf32>
    %96 = tpu.reciprocal %95 {approx = true} : vector<8x1xf32> -> vector<8x1xf32>
    %97 = vector.broadcast %96 : vector<8x1xf32> to vector<8x8xf32>
    %98 = arith.mulf %93, %97 : vector<8x8xf32>
    %99 = arith.truncf %98 : vector<8x8xf32> to vector<8x8xbf16>
    %cst_42 = arith.constant dense<0.000000e+00> : vector<8x16xf32>
    %100 = tpu.matmul %99, %83, %cst_42 {dimension_numbers = #tpu.dot_dimension_numbers<[1], [0], [0], [1], [0, 0, 1, 1], [], []>} : vector<8x8xbf16>, vector<8x16xbf16>, vector<8x16xf32> -> vector<8x16xf32>
    %101 = vector.extract_strided_slice %77 {offsets = [0, 16], sizes = [8, 16], strides = [1, 1]} : vector<8x96xf32> to vector<8x16xf32>
    %102 = arith.truncf %101 : vector<8x16xf32> to vector<8x16xbf16>
    %103 = vector.extract_strided_slice %77 {offsets = [0, 48], sizes = [8, 16], strides = [1, 1]} : vector<8x96xf32> to vector<8x16xf32>
    %104 = arith.truncf %103 : vector<8x16xf32> to vector<8x16xbf16>
    %105 = vector.extract_strided_slice %77 {offsets = [0, 80], sizes = [8, 16], strides = [1, 1]} : vector<8x96xf32> to vector<8x16xf32>
    %106 = arith.truncf %105 : vector<8x16xf32> to vector<8x16xbf16>
    %cst_43 = arith.constant dense<0.000000e+00> : vector<8x8xf32>
    %107 = tpu.matmul %102, %104, %cst_43 {dimension_numbers = #tpu.dot_dimension_numbers<[1], [1], [0], [0], [0, 0, 1, 0], [], []>} : vector<8x16xbf16>, vector<8x16xbf16>, vector<8x8xf32> -> vector<8x8xf32>
    %cst_44 = arith.constant 2.500000e-01 : f32
    %108 = vector.broadcast %cst_44 : f32 to vector<8x8xf32>
    %109 = arith.mulf %107, %108 : vector<8x8xf32>
    %cst_45 = arith.constant 0xFF800000 : f32
    %110 = vector.broadcast %cst_45 : f32 to vector<8x8xf32>
    %111 = arith.select %27, %109, %110 : vector<8x8xi1>, vector<8x8xf32>
    %cst_46 = arith.constant dense<0xFF800000> : vector<8xf32>
    %112 = vector.multi_reduction <maximumf>, %111, %cst_46 [1] : vector<8x8xf32> to vector<8xf32>
    %113 = vector.shape_cast %112 : vector<8xf32> to vector<8x1xf32>
    %114 = vector.broadcast %113 : vector<8x1xf32> to vector<8x8xf32>
    %115 = arith.subf %111, %114 : vector<8x8xf32>
    %116 = math.exp %115 : vector<8x8xf32>
    %cst_47 = arith.constant dense<0.000000e+00> : vector<8xf32>
    %117 = vector.multi_reduction <add>, %116, %cst_47 [1] : vector<8x8xf32> to vector<8xf32>
    %118 = vector.shape_cast %117 : vector<8xf32> to vector<8x1xf32>
    %119 = tpu.reciprocal %118 {approx = true} : vector<8x1xf32> -> vector<8x1xf32>
    %120 = vector.broadcast %119 : vector<8x1xf32> to vector<8x8xf32>
    %121 = arith.mulf %116, %120 : vector<8x8xf32>
    %122 = arith.truncf %121 : vector<8x8xf32> to vector<8x8xbf16>
    %cst_48 = arith.constant dense<0.000000e+00> : vector<8x16xf32>
    %123 = tpu.matmul %122, %106, %cst_48 {dimension_numbers = #tpu.dot_dimension_numbers<[1], [0], [0], [1], [0, 0, 1, 1], [], []>} : vector<8x8xbf16>, vector<8x16xbf16>, vector<8x16xf32> -> vector<8x16xf32>
    %124 = math.absf %100 : vector<8x16xf32>
    %cst_49 = arith.constant dense<0xFF800000> : vector<8xf32>
    %125 = vector.multi_reduction <maximumf>, %124, %cst_49 [1] : vector<8x16xf32> to vector<8xf32>
    %126 = vector.shape_cast %125 : vector<8xf32> to vector<8x1xf32>
    %cst_50 = arith.constant 9.99999974E-6 : f32
    %127 = vector.broadcast %cst_50 : f32 to vector<8x1xf32>
    %128 = arith.maximumf %127, %126 : vector<8x1xf32>
    %129 = math.absf %123 : vector<8x16xf32>
    %cst_51 = arith.constant dense<0xFF800000> : vector<8xf32>
    %130 = vector.multi_reduction <maximumf>, %129, %cst_51 [1] : vector<8x16xf32> to vector<8xf32>
    %131 = vector.shape_cast %130 : vector<8xf32> to vector<8x1xf32>
    %132 = arith.maximumf %128, %131 : vector<8x1xf32>
    %cst_52 = arith.constant 1.270000e+02 : f32
    %133 = vector.broadcast %cst_52 : f32 to vector<8x1xf32>
    %134 = arith.divf %133, %132 : vector<8x1xf32>
    %135 = vector.broadcast %134 : vector<8x1xf32> to vector<8x16xf32>
    %136 = arith.mulf %100, %135 : vector<8x16xf32>
    %137 = math.roundeven %136 : vector<8x16xf32>
    %138 = arith.truncf %137 : vector<8x16xf32> to vector<8x16xbf16>
    %139 = vector.extract_strided_slice %35 {offsets = [0, 0], sizes = [16, 32], strides = [1, 1]} : vector<32x32xbf16> to vector<16x32xbf16>
    %cst_53 = arith.constant dense<0.000000e+00> : vector<8x32xf32>
    %140 = tpu.matmul %138, %139, %cst_53 {dimension_numbers = #tpu.dot_dimension_numbers<[1], [0], [0], [1], [0, 0, 1, 1], [], []>} : vector<8x16xbf16>, vector<16x32xbf16>, vector<8x32xf32> -> vector<8x32xf32>
    %141 = vector.broadcast %134 : vector<8x1xf32> to vector<8x16xf32>
    %142 = arith.mulf %123, %141 : vector<8x16xf32>
    %143 = math.roundeven %142 : vector<8x16xf32>
    %144 = arith.truncf %143 : vector<8x16xf32> to vector<8x16xbf16>
    %145 = vector.extract_strided_slice %35 {offsets = [16, 0], sizes = [16, 32], strides = [1, 1]} : vector<32x32xbf16> to vector<16x32xbf16>
    %cst_54 = arith.constant dense<0.000000e+00> : vector<8x32xf32>
    %146 = tpu.matmul %144, %145, %cst_54 {dimension_numbers = #tpu.dot_dimension_numbers<[1], [0], [0], [1], [0, 0, 1, 1], [], []>} : vector<8x16xbf16>, vector<16x32xbf16>, vector<8x32xf32> -> vector<8x32xf32>
    %147 = arith.addf %140, %146 : vector<8x32xf32>
    %cst_55 = arith.constant 0.00787401571 : f32
    %148 = vector.broadcast %cst_55 : f32 to vector<8x1xf32>
    %149 = arith.mulf %132, %148 : vector<8x1xf32>
    %150 = vector.broadcast %29 : f32 to vector<8x1xf32>
    %151 = arith.mulf %149, %150 : vector<8x1xf32>
    %152 = vector.broadcast %151 : vector<8x1xf32> to vector<8x32xf32>
    %153 = arith.mulf %147, %152 : vector<8x32xf32>
    %154 = arith.addf %24, %153 : vector<8x32xf32>
    %c0_56 = arith.constant 0 : index
    %c0_57 = arith.constant 0 : index
    %c0_58 = arith.constant 0 : index
    %155 = vector.load %arg6[%c0_56, %c0_57, %c0_58] : memref<2x1x32xf32, #tpu.memory_space<vmem>>, vector<1x1x32xf32>
    %156 = vector.shape_cast %155 : vector<1x1x32xf32> to vector<1x32xf32>
    %cst_59 = arith.constant dense<0.000000e+00> : vector<8xf32>
    %157 = vector.multi_reduction <add>, %154, %cst_59 [1] : vector<8x32xf32> to vector<8xf32>
    %158 = vector.shape_cast %157 : vector<8xf32> to vector<8x1xf32>
    %cst_60 = arith.constant 3.200000e+01 : f32
    %159 = vector.broadcast %cst_60 : f32 to vector<8x1xf32>
    %160 = arith.divf %158, %159 : vector<8x1xf32>
    %161 = vector.broadcast %160 : vector<8x1xf32> to vector<8x32xf32>
    %162 = arith.subf %154, %161 : vector<8x32xf32>
    %163 = arith.mulf %162, %162 : vector<8x32xf32>
    %cst_61 = arith.constant dense<0.000000e+00> : vector<8xf32>
    %164 = vector.multi_reduction <add>, %163, %cst_61 [1] : vector<8x32xf32> to vector<8xf32>
    %165 = vector.shape_cast %164 : vector<8xf32> to vector<8x1xf32>
    %cst_62 = arith.constant 3.200000e+01 : f32
    %166 = vector.broadcast %cst_62 : f32 to vector<8x1xf32>
    %167 = arith.divf %165, %166 : vector<8x1xf32>
    %cst_63 = arith.constant 9.99999974E-6 : f32
    %168 = vector.broadcast %cst_63 : f32 to vector<8x1xf32>
    %169 = arith.addf %167, %168 : vector<8x1xf32>
    %170 = math.rsqrt %169 : vector<8x1xf32>
    %171 = vector.broadcast %170 : vector<8x1xf32> to vector<8x32xf32>
    %172 = arith.mulf %162, %171 : vector<8x32xf32>
    %173 = vector.broadcast %156 : vector<1x32xf32> to vector<8x32xf32>
    %174 = arith.mulf %172, %173 : vector<8x32xf32>
    %175 = math.absf %174 : vector<8x32xf32>
    %cst_64 = arith.constant dense<0xFF800000> : vector<8xf32>
    %176 = vector.multi_reduction <maximumf>, %175, %cst_64 [1] : vector<8x32xf32> to vector<8xf32>
    %177 = vector.shape_cast %176 : vector<8xf32> to vector<8x1xf32>
    %cst_65 = arith.constant 9.99999974E-6 : f32
    %178 = vector.broadcast %cst_65 : f32 to vector<8x1xf32>
    %179 = arith.maximumf %177, %178 : vector<8x1xf32>
    %cst_66 = arith.constant 1.270000e+02 : f32
    %180 = vector.broadcast %cst_66 : f32 to vector<8x1xf32>
    %181 = arith.divf %180, %179 : vector<8x1xf32>
    %182 = vector.broadcast %181 : vector<8x1xf32> to vector<8x32xf32>
    %183 = arith.mulf %174, %182 : vector<8x32xf32>
    %184 = math.roundeven %183 : vector<8x32xf32>
    %cst_67 = arith.constant 0.00787401571 : f32
    %185 = vector.broadcast %cst_67 : f32 to vector<8x1xf32>
    %186 = arith.mulf %179, %185 : vector<8x1xf32>
    %187 = arith.truncf %184 : vector<8x32xf32> to vector<8x32xbf16>
    %cst_68 = arith.constant dense<0.000000e+00> : vector<8x128xf32>
    %188 = tpu.matmul %187, %37, %cst_68 {dimension_numbers = #tpu.dot_dimension_numbers<[1], [0], [0], [1], [0, 0, 1, 1], [], []>} : vector<8x32xbf16>, vector<32x128xbf16>, vector<8x128xf32> -> vector<8x128xf32>
    %189 = vector.broadcast %30 : f32 to vector<8x1xf32>
    %190 = arith.mulf %186, %189 : vector<8x1xf32>
    %191 = vector.broadcast %190 : vector<8x1xf32> to vector<8x128xf32>
    %192 = arith.mulf %188, %191 : vector<8x128xf32>
    %cst_69 = arith.constant 0.000000e+00 : f32
    %193 = vector.broadcast %cst_69 : f32 to vector<8x128xf32>
    %194 = arith.maximumf %192, %193 : vector<8x128xf32>
    %195 = math.absf %194 : vector<8x128xf32>
    %cst_70 = arith.constant dense<0xFF800000> : vector<8xf32>
    %196 = vector.multi_reduction <maximumf>, %195, %cst_70 [1] : vector<8x128xf32> to vector<8xf32>
    %197 = vector.shape_cast %196 : vector<8xf32> to vector<8x1xf32>
    %cst_71 = arith.constant 9.99999974E-6 : f32
    %198 = vector.broadcast %cst_71 : f32 to vector<8x1xf32>
    %199 = arith.maximumf %197, %198 : vector<8x1xf32>
    %cst_72 = arith.constant 1.270000e+02 : f32
    %200 = vector.broadcast %cst_72 : f32 to vector<8x1xf32>
    %201 = arith.divf %200, %199 : vector<8x1xf32>
    %202 = vector.broadcast %201 : vector<8x1xf32> to vector<8x128xf32>
    %203 = arith.mulf %194, %202 : vector<8x128xf32>
    %204 = math.roundeven %203 : vector<8x128xf32>
    %cst_73 = arith.constant 0.00787401571 : f32
    %205 = vector.broadcast %cst_73 : f32 to vector<8x1xf32>
    %206 = arith.mulf %199, %205 : vector<8x1xf32>
    %207 = vector.broadcast %206 : vector<8x1xf32> to vector<8x128xf32>
    %208 = arith.mulf %204, %207 : vector<8x128xf32>
    %209 = math.absf %208 : vector<8x128xf32>
    %cst_74 = arith.constant dense<0xFF800000> : vector<8xf32>
    %210 = vector.multi_reduction <maximumf>, %209, %cst_74 [1] : vector<8x128xf32> to vector<8xf32>
    %211 = vector.shape_cast %210 : vector<8xf32> to vector<8x1xf32>
    %cst_75 = arith.constant 9.99999974E-6 : f32
    %212 = vector.broadcast %cst_75 : f32 to vector<8x1xf32>
    %213 = arith.maximumf %211, %212 : vector<8x1xf32>
    %cst_76 = arith.constant 1.270000e+02 : f32
    %214 = vector.broadcast %cst_76 : f32 to vector<8x1xf32>
    %215 = arith.divf %214, %213 : vector<8x1xf32>
    %216 = vector.broadcast %215 : vector<8x1xf32> to vector<8x128xf32>
    %217 = arith.mulf %208, %216 : vector<8x128xf32>
    %218 = math.roundeven %217 : vector<8x128xf32>
    %cst_77 = arith.constant 0.00787401571 : f32
    %219 = vector.broadcast %cst_77 : f32 to vector<8x1xf32>
    %220 = arith.mulf %213, %219 : vector<8x1xf32>
    %221 = arith.truncf %218 : vector<8x128xf32> to vector<8x128xbf16>
    %cst_78 = arith.constant dense<0.000000e+00> : vector<8x32xf32>
    %222 = tpu.matmul %221, %39, %cst_78 {dimension_numbers = #tpu.dot_dimension_numbers<[1], [0], [0], [1], [0, 0, 1, 1], [], []>} : vector<8x128xbf16>, vector<128x32xbf16>, vector<8x32xf32> -> vector<8x32xf32>
    %223 = vector.broadcast %31 : f32 to vector<8x1xf32>
    %224 = arith.mulf %220, %223 : vector<8x1xf32>
    %225 = vector.broadcast %224 : vector<8x1xf32> to vector<8x32xf32>
    %226 = arith.mulf %222, %225 : vector<8x32xf32>
    %227 = math.absf %226 : vector<8x32xf32>
    %cst_79 = arith.constant dense<0xFF800000> : vector<8xf32>
    %228 = vector.multi_reduction <maximumf>, %227, %cst_79 [1] : vector<8x32xf32> to vector<8xf32>
    %229 = vector.shape_cast %228 : vector<8xf32> to vector<8x1xf32>
    %cst_80 = arith.constant 9.99999974E-6 : f32
    %230 = vector.broadcast %cst_80 : f32 to vector<8x1xf32>
    %231 = arith.maximumf %229, %230 : vector<8x1xf32>
    %cst_81 = arith.constant 1.270000e+02 : f32
    %232 = vector.broadcast %cst_81 : f32 to vector<8x1xf32>
    %233 = arith.divf %232, %231 : vector<8x1xf32>
    %234 = vector.broadcast %233 : vector<8x1xf32> to vector<8x32xf32>
    %235 = arith.mulf %226, %234 : vector<8x32xf32>
    %236 = math.roundeven %235 : vector<8x32xf32>
    %cst_82 = arith.constant 0.00787401571 : f32
    %237 = vector.broadcast %cst_82 : f32 to vector<8x1xf32>
    %238 = arith.mulf %231, %237 : vector<8x1xf32>
    %239 = vector.broadcast %238 : vector<8x1xf32> to vector<8x32xf32>
    %240 = arith.mulf %236, %239 : vector<8x32xf32>
    %241 = arith.addf %154, %240 : vector<8x32xf32>
    %c4 = arith.constant 4 : index
    %242 = memref.load %arg1[%c4] : memref<8xf32, #tpu.memory_space<smem>>
    %c5 = arith.constant 5 : index
    %243 = memref.load %arg1[%c5] : memref<8xf32, #tpu.memory_space<smem>>
    %c6 = arith.constant 6 : index
    %244 = memref.load %arg1[%c6] : memref<8xf32, #tpu.memory_space<smem>>
    %c7 = arith.constant 7 : index
    %245 = memref.load %arg1[%c7] : memref<8xf32, #tpu.memory_space<smem>>
    %c1_83 = arith.constant 1 : index
    %c0_84 = arith.constant 0 : index
    %c0_85 = arith.constant 0 : index
    %246 = vector.load %arg8[%c1_83, %c0_84, %c0_85] : memref<2x32x96xbf16, #tpu.memory_space<vmem>>, vector<1x32x96xbf16>
    %247 = vector.shape_cast %246 : vector<1x32x96xbf16> to vector<32x96xbf16>
    %c1_86 = arith.constant 1 : index
    %c0_87 = arith.constant 0 : index
    %c0_88 = arith.constant 0 : index
    %248 = vector.load %arg9[%c1_86, %c0_87, %c0_88] : memref<2x32x32xbf16, #tpu.memory_space<vmem>>, vector<1x32x32xbf16>
    %249 = vector.shape_cast %248 : vector<1x32x32xbf16> to vector<32x32xbf16>
    %c1_89 = arith.constant 1 : index
    %c0_90 = arith.constant 0 : index
    %c0_91 = arith.constant 0 : index
    %250 = vector.load %arg10[%c1_89, %c0_90, %c0_91] : memref<2x32x128xbf16, #tpu.memory_space<vmem>>, vector<1x32x128xbf16>
    %251 = vector.shape_cast %250 : vector<1x32x128xbf16> to vector<32x128xbf16>
    %c1_92 = arith.constant 1 : index
    %c0_93 = arith.constant 0 : index
    %c0_94 = arith.constant 0 : index
    %252 = vector.load %arg11[%c1_92, %c0_93, %c0_94] : memref<2x128x32xbf16, #tpu.memory_space<vmem>>, vector<1x128x32xbf16>
    %253 = vector.shape_cast %252 : vector<1x128x32xbf16> to vector<128x32xbf16>
    %c1_95 = arith.constant 1 : index
    %c0_96 = arith.constant 0 : index
    %c0_97 = arith.constant 0 : index
    %254 = vector.load %arg5[%c1_95, %c0_96, %c0_97] : memref<2x1x32xf32, #tpu.memory_space<vmem>>, vector<1x1x32xf32>
    %255 = vector.shape_cast %254 : vector<1x1x32xf32> to vector<1x32xf32>
    %cst_98 = arith.constant dense<0.000000e+00> : vector<8xf32>
    %256 = vector.multi_reduction <add>, %241, %cst_98 [1] : vector<8x32xf32> to vector<8xf32>
    %257 = vector.shape_cast %256 : vector<8xf32> to vector<8x1xf32>
    %cst_99 = arith.constant 3.200000e+01 : f32
    %258 = vector.broadcast %cst_99 : f32 to vector<8x1xf32>
    %259 = arith.divf %257, %258 : vector<8x1xf32>
    %260 = vector.broadcast %259 : vector<8x1xf32> to vector<8x32xf32>
    %261 = arith.subf %241, %260 : vector<8x32xf32>
    %262 = arith.mulf %261, %261 : vector<8x32xf32>
    %cst_100 = arith.constant dense<0.000000e+00> : vector<8xf32>
    %263 = vector.multi_reduction <add>, %262, %cst_100 [1] : vector<8x32xf32> to vector<8xf32>
    %264 = vector.shape_cast %263 : vector<8xf32> to vector<8x1xf32>
    %cst_101 = arith.constant 3.200000e+01 : f32
    %265 = vector.broadcast %cst_101 : f32 to vector<8x1xf32>
    %266 = arith.divf %264, %265 : vector<8x1xf32>
    %cst_102 = arith.constant 9.99999974E-6 : f32
    %267 = vector.broadcast %cst_102 : f32 to vector<8x1xf32>
    %268 = arith.addf %266, %267 : vector<8x1xf32>
    %269 = math.rsqrt %268 : vector<8x1xf32>
    %270 = vector.broadcast %269 : vector<8x1xf32> to vector<8x32xf32>
    %271 = arith.mulf %261, %270 : vector<8x32xf32>
    %272 = vector.broadcast %255 : vector<1x32xf32> to vector<8x32xf32>
    %273 = arith.mulf %271, %272 : vector<8x32xf32>
    %274 = math.absf %273 : vector<8x32xf32>
    %cst_103 = arith.constant dense<0xFF800000> : vector<8xf32>
    %275 = vector.multi_reduction <maximumf>, %274, %cst_103 [1] : vector<8x32xf32> to vector<8xf32>
    %276 = vector.shape_cast %275 : vector<8xf32> to vector<8x1xf32>
    %cst_104 = arith.constant 9.99999974E-6 : f32
    %277 = vector.broadcast %cst_104 : f32 to vector<8x1xf32>
    %278 = arith.maximumf %276, %277 : vector<8x1xf32>
    %cst_105 = arith.constant 1.270000e+02 : f32
    %279 = vector.broadcast %cst_105 : f32 to vector<8x1xf32>
    %280 = arith.divf %279, %278 : vector<8x1xf32>
    %281 = vector.broadcast %280 : vector<8x1xf32> to vector<8x32xf32>
    %282 = arith.mulf %273, %281 : vector<8x32xf32>
    %283 = math.roundeven %282 : vector<8x32xf32>
    %cst_106 = arith.constant 0.00787401571 : f32
    %284 = vector.broadcast %cst_106 : f32 to vector<8x1xf32>
    %285 = arith.mulf %278, %284 : vector<8x1xf32>
    %286 = arith.truncf %283 : vector<8x32xf32> to vector<8x32xbf16>
    %cst_107 = arith.constant dense<0.000000e+00> : vector<8x96xf32>
    %287 = tpu.matmul %286, %247, %cst_107 {dimension_numbers = #tpu.dot_dimension_numbers<[1], [0], [0], [1], [0, 0, 1, 1], [], []>} : vector<8x32xbf16>, vector<32x96xbf16>, vector<8x96xf32> -> vector<8x96xf32>
    %288 = vector.broadcast %242 : f32 to vector<8x1xf32>
    %289 = arith.mulf %285, %288 : vector<8x1xf32>
    %290 = vector.broadcast %289 : vector<8x1xf32> to vector<8x96xf32>
    %291 = arith.mulf %287, %290 : vector<8x96xf32>
    %292 = vector.extract_strided_slice %291 {offsets = [0, 0], sizes = [8, 16], strides = [1, 1]} : vector<8x96xf32> to vector<8x16xf32>
    %293 = arith.truncf %292 : vector<8x16xf32> to vector<8x16xbf16>
    %294 = vector.extract_strided_slice %291 {offsets = [0, 32], sizes = [8, 16], strides = [1, 1]} : vector<8x96xf32> to vector<8x16xf32>
    %295 = arith.truncf %294 : vector<8x16xf32> to vector<8x16xbf16>
    %296 = vector.extract_strided_slice %291 {offsets = [0, 64], sizes = [8, 16], strides = [1, 1]} : vector<8x96xf32> to vector<8x16xf32>
    %297 = arith.truncf %296 : vector<8x16xf32> to vector<8x16xbf16>
    %cst_108 = arith.constant dense<0.000000e+00> : vector<8x8xf32>
    %298 = tpu.matmul %293, %295, %cst_108 {dimension_numbers = #tpu.dot_dimension_numbers<[1], [1], [0], [0], [0, 0, 1, 0], [], []>} : vector<8x16xbf16>, vector<8x16xbf16>, vector<8x8xf32> -> vector<8x8xf32>
    %cst_109 = arith.constant 2.500000e-01 : f32
    %299 = vector.broadcast %cst_109 : f32 to vector<8x8xf32>
    %300 = arith.mulf %298, %299 : vector<8x8xf32>
    %cst_110 = arith.constant 0xFF800000 : f32
    %301 = vector.broadcast %cst_110 : f32 to vector<8x8xf32>
    %302 = arith.select %27, %300, %301 : vector<8x8xi1>, vector<8x8xf32>
    %cst_111 = arith.constant dense<0xFF800000> : vector<8xf32>
    %303 = vector.multi_reduction <maximumf>, %302, %cst_111 [1] : vector<8x8xf32> to vector<8xf32>
    %304 = vector.shape_cast %303 : vector<8xf32> to vector<8x1xf32>
    %305 = vector.broadcast %304 : vector<8x1xf32> to vector<8x8xf32>
    %306 = arith.subf %302, %305 : vector<8x8xf32>
    %307 = math.exp %306 : vector<8x8xf32>
    %cst_112 = arith.constant dense<0.000000e+00> : vector<8xf32>
    %308 = vector.multi_reduction <add>, %307, %cst_112 [1] : vector<8x8xf32> to vector<8xf32>
    %309 = vector.shape_cast %308 : vector<8xf32> to vector<8x1xf32>
    %310 = tpu.reciprocal %309 {approx = true} : vector<8x1xf32> -> vector<8x1xf32>
    %311 = vector.broadcast %310 : vector<8x1xf32> to vector<8x8xf32>
    %312 = arith.mulf %307, %311 : vector<8x8xf32>
    %313 = arith.truncf %312 : vector<8x8xf32> to vector<8x8xbf16>
    %cst_113 = arith.constant dense<0.000000e+00> : vector<8x16xf32>
    %314 = tpu.matmul %313, %297, %cst_113 {dimension_numbers = #tpu.dot_dimension_numbers<[1], [0], [0], [1], [0, 0, 1, 1], [], []>} : vector<8x8xbf16>, vector<8x16xbf16>, vector<8x16xf32> -> vector<8x16xf32>
    %315 = vector.extract_strided_slice %291 {offsets = [0, 16], sizes = [8, 16], strides = [1, 1]} : vector<8x96xf32> to vector<8x16xf32>
    %316 = arith.truncf %315 : vector<8x16xf32> to vector<8x16xbf16>
    %317 = vector.extract_strided_slice %291 {offsets = [0, 48], sizes = [8, 16], strides = [1, 1]} : vector<8x96xf32> to vector<8x16xf32>
    %318 = arith.truncf %317 : vector<8x16xf32> to vector<8x16xbf16>
    %319 = vector.extract_strided_slice %291 {offsets = [0, 80], sizes = [8, 16], strides = [1, 1]} : vector<8x96xf32> to vector<8x16xf32>
    %320 = arith.truncf %319 : vector<8x16xf32> to vector<8x16xbf16>
    %cst_114 = arith.constant dense<0.000000e+00> : vector<8x8xf32>
    %321 = tpu.matmul %316, %318, %cst_114 {dimension_numbers = #tpu.dot_dimension_numbers<[1], [1], [0], [0], [0, 0, 1, 0], [], []>} : vector<8x16xbf16>, vector<8x16xbf16>, vector<8x8xf32> -> vector<8x8xf32>
    %cst_115 = arith.constant 2.500000e-01 : f32
    %322 = vector.broadcast %cst_115 : f32 to vector<8x8xf32>
    %323 = arith.mulf %321, %322 : vector<8x8xf32>
    %cst_116 = arith.constant 0xFF800000 : f32
    %324 = vector.broadcast %cst_116 : f32 to vector<8x8xf32>
    %325 = arith.select %27, %323, %324 : vector<8x8xi1>, vector<8x8xf32>
    %cst_117 = arith.constant dense<0xFF800000> : vector<8xf32>
    %326 = vector.multi_reduction <maximumf>, %325, %cst_117 [1] : vector<8x8xf32> to vector<8xf32>
    %327 = vector.shape_cast %326 : vector<8xf32> to vector<8x1xf32>
    %328 = vector.broadcast %327 : vector<8x1xf32> to vector<8x8xf32>
    %329 = arith.subf %325, %328 : vector<8x8xf32>
    %330 = math.exp %329 : vector<8x8xf32>
    %cst_118 = arith.constant dense<0.000000e+00> : vector<8xf32>
    %331 = vector.multi_reduction <add>, %330, %cst_118 [1] : vector<8x8xf32> to vector<8xf32>
    %332 = vector.shape_cast %331 : vector<8xf32> to vector<8x1xf32>
    %333 = tpu.reciprocal %332 {approx = true} : vector<8x1xf32> -> vector<8x1xf32>
    %334 = vector.broadcast %333 : vector<8x1xf32> to vector<8x8xf32>
    %335 = arith.mulf %330, %334 : vector<8x8xf32>
    %336 = arith.truncf %335 : vector<8x8xf32> to vector<8x8xbf16>
    %cst_119 = arith.constant dense<0.000000e+00> : vector<8x16xf32>
    %337 = tpu.matmul %336, %320, %cst_119 {dimension_numbers = #tpu.dot_dimension_numbers<[1], [0], [0], [1], [0, 0, 1, 1], [], []>} : vector<8x8xbf16>, vector<8x16xbf16>, vector<8x16xf32> -> vector<8x16xf32>
    %338 = math.absf %314 : vector<8x16xf32>
    %cst_120 = arith.constant dense<0xFF800000> : vector<8xf32>
    %339 = vector.multi_reduction <maximumf>, %338, %cst_120 [1] : vector<8x16xf32> to vector<8xf32>
    %340 = vector.shape_cast %339 : vector<8xf32> to vector<8x1xf32>
    %cst_121 = arith.constant 9.99999974E-6 : f32
    %341 = vector.broadcast %cst_121 : f32 to vector<8x1xf32>
    %342 = arith.maximumf %341, %340 : vector<8x1xf32>
    %343 = math.absf %337 : vector<8x16xf32>
    %cst_122 = arith.constant dense<0xFF800000> : vector<8xf32>
    %344 = vector.multi_reduction <maximumf>, %343, %cst_122 [1] : vector<8x16xf32> to vector<8xf32>
    %345 = vector.shape_cast %344 : vector<8xf32> to vector<8x1xf32>
    %346 = arith.maximumf %342, %345 : vector<8x1xf32>
    %cst_123 = arith.constant 1.270000e+02 : f32
    %347 = vector.broadcast %cst_123 : f32 to vector<8x1xf32>
    %348 = arith.divf %347, %346 : vector<8x1xf32>
    %349 = vector.broadcast %348 : vector<8x1xf32> to vector<8x16xf32>
    %350 = arith.mulf %314, %349 : vector<8x16xf32>
    %351 = math.roundeven %350 : vector<8x16xf32>
    %352 = arith.truncf %351 : vector<8x16xf32> to vector<8x16xbf16>
    %353 = vector.extract_strided_slice %249 {offsets = [0, 0], sizes = [16, 32], strides = [1, 1]} : vector<32x32xbf16> to vector<16x32xbf16>
    %cst_124 = arith.constant dense<0.000000e+00> : vector<8x32xf32>
    %354 = tpu.matmul %352, %353, %cst_124 {dimension_numbers = #tpu.dot_dimension_numbers<[1], [0], [0], [1], [0, 0, 1, 1], [], []>} : vector<8x16xbf16>, vector<16x32xbf16>, vector<8x32xf32> -> vector<8x32xf32>
    %355 = vector.broadcast %348 : vector<8x1xf32> to vector<8x16xf32>
    %356 = arith.mulf %337, %355 : vector<8x16xf32>
    %357 = math.roundeven %356 : vector<8x16xf32>
    %358 = arith.truncf %357 : vector<8x16xf32> to vector<8x16xbf16>
    %359 = vector.extract_strided_slice %249 {offsets = [16, 0], sizes = [16, 32], strides = [1, 1]} : vector<32x32xbf16> to vector<16x32xbf16>
    %cst_125 = arith.constant dense<0.000000e+00> : vector<8x32xf32>
    %360 = tpu.matmul %358, %359, %cst_125 {dimension_numbers = #tpu.dot_dimension_numbers<[1], [0], [0], [1], [0, 0, 1, 1], [], []>} : vector<8x16xbf16>, vector<16x32xbf16>, vector<8x32xf32> -> vector<8x32xf32>
    %361 = arith.addf %354, %360 : vector<8x32xf32>
    %cst_126 = arith.constant 0.00787401571 : f32
    %362 = vector.broadcast %cst_126 : f32 to vector<8x1xf32>
    %363 = arith.mulf %346, %362 : vector<8x1xf32>
    %364 = vector.broadcast %243 : f32 to vector<8x1xf32>
    %365 = arith.mulf %363, %364 : vector<8x1xf32>
    %366 = vector.broadcast %365 : vector<8x1xf32> to vector<8x32xf32>
    %367 = arith.mulf %361, %366 : vector<8x32xf32>
    %368 = arith.addf %241, %367 : vector<8x32xf32>
    %c1_127 = arith.constant 1 : index
    %c0_128 = arith.constant 0 : index
    %c0_129 = arith.constant 0 : index
    %369 = vector.load %arg6[%c1_127, %c0_128, %c0_129] : memref<2x1x32xf32, #tpu.memory_space<vmem>>, vector<1x1x32xf32>
    %370 = vector.shape_cast %369 : vector<1x1x32xf32> to vector<1x32xf32>
    %cst_130 = arith.constant dense<0.000000e+00> : vector<8xf32>
    %371 = vector.multi_reduction <add>, %368, %cst_130 [1] : vector<8x32xf32> to vector<8xf32>
    %372 = vector.shape_cast %371 : vector<8xf32> to vector<8x1xf32>
    %cst_131 = arith.constant 3.200000e+01 : f32
    %373 = vector.broadcast %cst_131 : f32 to vector<8x1xf32>
    %374 = arith.divf %372, %373 : vector<8x1xf32>
    %375 = vector.broadcast %374 : vector<8x1xf32> to vector<8x32xf32>
    %376 = arith.subf %368, %375 : vector<8x32xf32>
    %377 = arith.mulf %376, %376 : vector<8x32xf32>
    %cst_132 = arith.constant dense<0.000000e+00> : vector<8xf32>
    %378 = vector.multi_reduction <add>, %377, %cst_132 [1] : vector<8x32xf32> to vector<8xf32>
    %379 = vector.shape_cast %378 : vector<8xf32> to vector<8x1xf32>
    %cst_133 = arith.constant 3.200000e+01 : f32
    %380 = vector.broadcast %cst_133 : f32 to vector<8x1xf32>
    %381 = arith.divf %379, %380 : vector<8x1xf32>
    %cst_134 = arith.constant 9.99999974E-6 : f32
    %382 = vector.broadcast %cst_134 : f32 to vector<8x1xf32>
    %383 = arith.addf %381, %382 : vector<8x1xf32>
    %384 = math.rsqrt %383 : vector<8x1xf32>
    %385 = vector.broadcast %384 : vector<8x1xf32> to vector<8x32xf32>
    %386 = arith.mulf %376, %385 : vector<8x32xf32>
    %387 = vector.broadcast %370 : vector<1x32xf32> to vector<8x32xf32>
    %388 = arith.mulf %386, %387 : vector<8x32xf32>
    %389 = math.absf %388 : vector<8x32xf32>
    %cst_135 = arith.constant dense<0xFF800000> : vector<8xf32>
    %390 = vector.multi_reduction <maximumf>, %389, %cst_135 [1] : vector<8x32xf32> to vector<8xf32>
    %391 = vector.shape_cast %390 : vector<8xf32> to vector<8x1xf32>
    %cst_136 = arith.constant 9.99999974E-6 : f32
    %392 = vector.broadcast %cst_136 : f32 to vector<8x1xf32>
    %393 = arith.maximumf %391, %392 : vector<8x1xf32>
    %cst_137 = arith.constant 1.270000e+02 : f32
    %394 = vector.broadcast %cst_137 : f32 to vector<8x1xf32>
    %395 = arith.divf %394, %393 : vector<8x1xf32>
    %396 = vector.broadcast %395 : vector<8x1xf32> to vector<8x32xf32>
    %397 = arith.mulf %388, %396 : vector<8x32xf32>
    %398 = math.roundeven %397 : vector<8x32xf32>
    %cst_138 = arith.constant 0.00787401571 : f32
    %399 = vector.broadcast %cst_138 : f32 to vector<8x1xf32>
    %400 = arith.mulf %393, %399 : vector<8x1xf32>
    %401 = arith.truncf %398 : vector<8x32xf32> to vector<8x32xbf16>
    %cst_139 = arith.constant dense<0.000000e+00> : vector<8x128xf32>
    %402 = tpu.matmul %401, %251, %cst_139 {dimension_numbers = #tpu.dot_dimension_numbers<[1], [0], [0], [1], [0, 0, 1, 1], [], []>} : vector<8x32xbf16>, vector<32x128xbf16>, vector<8x128xf32> -> vector<8x128xf32>
    %403 = vector.broadcast %244 : f32 to vector<8x1xf32>
    %404 = arith.mulf %400, %403 : vector<8x1xf32>
    %405 = vector.broadcast %404 : vector<8x1xf32> to vector<8x128xf32>
    %406 = arith.mulf %402, %405 : vector<8x128xf32>
    %cst_140 = arith.constant 0.000000e+00 : f32
    %407 = vector.broadcast %cst_140 : f32 to vector<8x128xf32>
    %408 = arith.maximumf %406, %407 : vector<8x128xf32>
    %409 = math.absf %408 : vector<8x128xf32>
    %cst_141 = arith.constant dense<0xFF800000> : vector<8xf32>
    %410 = vector.multi_reduction <maximumf>, %409, %cst_141 [1] : vector<8x128xf32> to vector<8xf32>
    %411 = vector.shape_cast %410 : vector<8xf32> to vector<8x1xf32>
    %cst_142 = arith.constant 9.99999974E-6 : f32
    %412 = vector.broadcast %cst_142 : f32 to vector<8x1xf32>
    %413 = arith.maximumf %411, %412 : vector<8x1xf32>
    %cst_143 = arith.constant 1.270000e+02 : f32
    %414 = vector.broadcast %cst_143 : f32 to vector<8x1xf32>
    %415 = arith.divf %414, %413 : vector<8x1xf32>
    %416 = vector.broadcast %415 : vector<8x1xf32> to vector<8x128xf32>
    %417 = arith.mulf %408, %416 : vector<8x128xf32>
    %418 = math.roundeven %417 : vector<8x128xf32>
    %cst_144 = arith.constant 0.00787401571 : f32
    %419 = vector.broadcast %cst_144 : f32 to vector<8x1xf32>
    %420 = arith.mulf %413, %419 : vector<8x1xf32>
    %421 = vector.broadcast %420 : vector<8x1xf32> to vector<8x128xf32>
    %422 = arith.mulf %418, %421 : vector<8x128xf32>
    %423 = math.absf %422 : vector<8x128xf32>
    %cst_145 = arith.constant dense<0xFF800000> : vector<8xf32>
    %424 = vector.multi_reduction <maximumf>, %423, %cst_145 [1] : vector<8x128xf32> to vector<8xf32>
    %425 = vector.shape_cast %424 : vector<8xf32> to vector<8x1xf32>
    %cst_146 = arith.constant 9.99999974E-6 : f32
    %426 = vector.broadcast %cst_146 : f32 to vector<8x1xf32>
    %427 = arith.maximumf %425, %426 : vector<8x1xf32>
    %cst_147 = arith.constant 1.270000e+02 : f32
    %428 = vector.broadcast %cst_147 : f32 to vector<8x1xf32>
    %429 = arith.divf %428, %427 : vector<8x1xf32>
    %430 = vector.broadcast %429 : vector<8x1xf32> to vector<8x128xf32>
    %431 = arith.mulf %422, %430 : vector<8x128xf32>
    %432 = math.roundeven %431 : vector<8x128xf32>
    %cst_148 = arith.constant 0.00787401571 : f32
    %433 = vector.broadcast %cst_148 : f32 to vector<8x1xf32>
    %434 = arith.mulf %427, %433 : vector<8x1xf32>
    %435 = arith.truncf %432 : vector<8x128xf32> to vector<8x128xbf16>
    %cst_149 = arith.constant dense<0.000000e+00> : vector<8x32xf32>
    %436 = tpu.matmul %435, %253, %cst_149 {dimension_numbers = #tpu.dot_dimension_numbers<[1], [0], [0], [1], [0, 0, 1, 1], [], []>} : vector<8x128xbf16>, vector<128x32xbf16>, vector<8x32xf32> -> vector<8x32xf32>
    %437 = vector.broadcast %245 : f32 to vector<8x1xf32>
    %438 = arith.mulf %434, %437 : vector<8x1xf32>
    %439 = vector.broadcast %438 : vector<8x1xf32> to vector<8x32xf32>
    %440 = arith.mulf %436, %439 : vector<8x32xf32>
    %441 = math.absf %440 : vector<8x32xf32>
    %cst_150 = arith.constant dense<0xFF800000> : vector<8xf32>
    %442 = vector.multi_reduction <maximumf>, %441, %cst_150 [1] : vector<8x32xf32> to vector<8xf32>
    %443 = vector.shape_cast %442 : vector<8xf32> to vector<8x1xf32>
    %cst_151 = arith.constant 9.99999974E-6 : f32
    %444 = vector.broadcast %cst_151 : f32 to vector<8x1xf32>
    %445 = arith.maximumf %443, %444 : vector<8x1xf32>
    %cst_152 = arith.constant 1.270000e+02 : f32
    %446 = vector.broadcast %cst_152 : f32 to vector<8x1xf32>
    %447 = arith.divf %446, %445 : vector<8x1xf32>
    %448 = vector.broadcast %447 : vector<8x1xf32> to vector<8x32xf32>
    %449 = arith.mulf %440, %448 : vector<8x32xf32>
    %450 = math.roundeven %449 : vector<8x32xf32>
    %cst_153 = arith.constant 0.00787401571 : f32
    %451 = vector.broadcast %cst_153 : f32 to vector<8x1xf32>
    %452 = arith.mulf %445, %451 : vector<8x1xf32>
    %453 = vector.broadcast %452 : vector<8x1xf32> to vector<8x32xf32>
    %454 = arith.mulf %450, %453 : vector<8x32xf32>
    %455 = arith.addf %368, %454 : vector<8x32xf32>
    %456 = vector.extract_strided_slice %455 {offsets = [7, 0], sizes = [1, 32], strides = [1, 1]} : vector<8x32xf32> to vector<1x32xf32>
    %c0_154 = arith.constant 0 : index
    %c0_155 = arith.constant 0 : index
    %457 = vector.load %arg7[%c0_154, %c0_155] : memref<1x32xf32, #tpu.memory_space<vmem>>, vector<1x32xf32>
    %cst_156 = arith.constant dense<0.000000e+00> : vector<1xf32>
    %458 = vector.multi_reduction <add>, %456, %cst_156 [1] : vector<1x32xf32> to vector<1xf32>
    %459 = vector.shape_cast %458 : vector<1xf32> to vector<1x1xf32>
    %cst_157 = arith.constant 3.200000e+01 : f32
    %460 = vector.broadcast %cst_157 : f32 to vector<1x1xf32>
    %461 = arith.divf %459, %460 : vector<1x1xf32>
    %462 = vector.broadcast %461 : vector<1x1xf32> to vector<1x32xf32>
    %463 = arith.subf %456, %462 : vector<1x32xf32>
    %464 = arith.mulf %463, %463 : vector<1x32xf32>
    %cst_158 = arith.constant dense<0.000000e+00> : vector<1xf32>
    %465 = vector.multi_reduction <add>, %464, %cst_158 [1] : vector<1x32xf32> to vector<1xf32>
    %466 = vector.shape_cast %465 : vector<1xf32> to vector<1x1xf32>
    %cst_159 = arith.constant 3.200000e+01 : f32
    %467 = vector.broadcast %cst_159 : f32 to vector<1x1xf32>
    %468 = arith.divf %466, %467 : vector<1x1xf32>
    %cst_160 = arith.constant 9.99999974E-6 : f32
    %469 = vector.broadcast %cst_160 : f32 to vector<1x1xf32>
    %470 = arith.addf %468, %469 : vector<1x1xf32>
    %471 = math.rsqrt %470 : vector<1x1xf32>
    %472 = vector.broadcast %471 : vector<1x1xf32> to vector<1x32xf32>
    %473 = arith.mulf %463, %472 : vector<1x32xf32>
    %474 = arith.mulf %473, %457 : vector<1x32xf32>
    %475 = math.absf %474 : vector<1x32xf32>
    %cst_161 = arith.constant dense<0xFF800000> : vector<1xf32>
    %476 = vector.multi_reduction <maximumf>, %475, %cst_161 [1] : vector<1x32xf32> to vector<1xf32>
    %477 = vector.shape_cast %476 : vector<1xf32> to vector<1x1xf32>
    %cst_162 = arith.constant 9.99999974E-6 : f32
    %478 = vector.broadcast %cst_162 : f32 to vector<1x1xf32>
    %479 = arith.maximumf %477, %478 : vector<1x1xf32>
    %cst_163 = arith.constant 1.270000e+02 : f32
    %480 = vector.broadcast %cst_163 : f32 to vector<1x1xf32>
    %481 = arith.divf %480, %479 : vector<1x1xf32>
    %482 = vector.broadcast %481 : vector<1x1xf32> to vector<1x32xf32>
    %483 = arith.mulf %474, %482 : vector<1x32xf32>
    %484 = math.roundeven %483 : vector<1x32xf32>
    %cst_164 = arith.constant 0.00787401571 : f32
    %485 = vector.broadcast %cst_164 : f32 to vector<1x1xf32>
    %486 = arith.mulf %479, %485 : vector<1x1xf32>
    %487 = vector.broadcast %486 : vector<1x1xf32> to vector<1x32xf32>
    %488 = arith.mulf %484, %487 : vector<1x32xf32>
    %c0_165 = arith.constant 0 : index
    %c0_166 = arith.constant 0 : index
    %489 = vector.load %arg12[%c0_165, %c0_166] : memref<32x64xf32, #tpu.memory_space<vmem>>, vector<32x64xf32>
    %cst_167 = arith.constant dense<0.000000e+00> : vector<1x64xf32>
    %490 = tpu.matmul %488, %489, %cst_167 {dimension_numbers = #tpu.dot_dimension_numbers<[1], [0], [0], [1], [0, 0, 1, 1], [], []>} : vector<1x32xf32>, vector<32x64xf32>, vector<1x64xf32> -> vector<1x64xf32>
    %491 = vector.shape_cast %490 : vector<1x64xf32> to vector<1x1x64xf32>
    %c0_168 = arith.constant 0 : index
    %c0_169 = arith.constant 0 : index
    %c0_170 = arith.constant 0 : index
    %492 = vector.load %arg13[%c0_168, %c0_169, %c0_170] : memref<1x1x64xf32, #tpu.memory_space<vmem>>, vector<1x1x64xf32>
    tpu.vector_store %arg13[%c0_168, %c0_169, %c0_170], %491 {strides = array<i32>} : memref<1x1x64xf32, #tpu.memory_space<vmem>>, vector<1x1x64xf32>,
    return
  }
  func.func @transform_0(%arg0: i32) -> i32 {
    %c0_i32 = arith.constant 0 : i32
    %c0_i32_0 = arith.constant 0 : i32
    return %c0_i32 : i32
  }
  func.func @transform_1(%arg0: i32) -> (i32, i32) {
    %c0_i32 = arith.constant 0 : i32
    %c0_i32_0 = arith.constant 0 : i32
    return %arg0, %c0_i32 : i32, i32
  }
  func.func @transform_2(%arg0: i32) -> (i32, i32) {
    %c0_i32 = arith.constant 0 : i32
    %c0_i32_0 = arith.constant 0 : i32
    %c0_i32_1 = arith.constant 0 : i32
    return %c0_i32, %c0_i32_0 : i32, i32
  }
  func.func @transform_3(%arg0: i32) -> (i32, i32) {
    %c0_i32 = arith.constant 0 : i32
    %c0_i32_0 = arith.constant 0 : i32
    %c0_i32_1 = arith.constant 0 : i32
    return %c0_i32, %c0_i32_0 : i32, i32
  }
  func.func @transform_4(%arg0: i32) -> (i32, i32, i32) {
    %c0_i32 = arith.constant 0 : i32
    %c0_i32_0 = arith.constant 0 : i32
    %c0_i32_1 = arith.constant 0 : i32
    %c0_i32_2 = arith.constant 0 : i32
    return %c0_i32, %c0_i32_0, %c0_i32_1 : i32, i32, i32
  }
  func.func @transform_5(%arg0: i32) -> (i32, i32, i32) {
    %c0_i32 = arith.constant 0 : i32
    %c0_i32_0 = arith.constant 0 : i32
    %c0_i32_1 = arith.constant 0 : i32
    %c0_i32_2 = arith.constant 0 : i32
    return %c0_i32, %c0_i32_0, %c0_i32_1 : i32, i32, i32
  }
  func.func @transform_6(%arg0: i32) -> (i32, i32) {
    %c0_i32 = arith.constant 0 : i32
    %c0_i32_0 = arith.constant 0 : i32
    %c0_i32_1 = arith.constant 0 : i32
    return %c0_i32, %c0_i32_0 : i32, i32
  }
  func.func @transform_7(%arg0: i32) -> (i32, i32, i32) {
    %c0_i32 = arith.constant 0 : i32
    %c0_i32_0 = arith.constant 0 : i32
    %c0_i32_1 = arith.constant 0 : i32
    %c0_i32_2 = arith.constant 0 : i32
    return %c0_i32, %c0_i32_0, %c0_i32_1 : i32, i32, i32
  }
  func.func @transform_8(%arg0: i32) -> (i32, i32, i32) {
    %c0_i32 = arith.constant 0 : i32
    %c0_i32_0 = arith.constant 0 : i32
    %c0_i32_1 = arith.constant 0 : i32
    %c0_i32_2 = arith.constant 0 : i32
    return %c0_i32, %c0_i32_0, %c0_i32_1 : i32, i32, i32
  }
  func.func @transform_9(%arg0: i32) -> (i32, i32, i32) {
    %c0_i32 = arith.constant 0 : i32
    %c0_i32_0 = arith.constant 0 : i32
    %c0_i32_1 = arith.constant 0 : i32
    %c0_i32_2 = arith.constant 0 : i32
    return %c0_i32, %c0_i32_0, %c0_i32_1 : i32, i32, i32
  }
  func.func @transform_10(%arg0: i32) -> (i32, i32, i32) {
    %c0_i32 = arith.constant 0 : i32
    %c0_i32_0 = arith.constant 0 : i32
    %c0_i32_1 = arith.constant 0 : i32
    %c0_i32_2 = arith.constant 0 : i32
    return %c0_i32, %c0_i32_0, %c0_i32_1 : i32, i32, i32
  }
  func.func @transform_11(%arg0: i32) -> (i32, i32) {
    %c0_i32 = arith.constant 0 : i32
    %c0_i32_0 = arith.constant 0 : i32
    %c0_i32_1 = arith.constant 0 : i32
    return %c0_i32, %c0_i32_0 : i32, i32
  }
  func.func @transform_12(%arg0: i32) -> (i32, i32, i32) {
    %c0_i32 = arith.constant 0 : i32
    %c0_i32_0 = arith.constant 0 : i32
    %c0_i32_1 = arith.constant 0 : i32
    return %arg0, %c0_i32, %c0_i32_0 : i32, i32, i32
  }
}

</mosaic_0001>

<llo_original>
// kernel: forward.1
$region0: #{forward.1}
  #allocation0 [shape = 'u32[]', space=smem, size = 0x4, offset = 0x4, fixed_abs, tag = 'smem constant byte address 0x4 - core index']
  #allocation1 [shape = 'u32[144,128]{1,0:T(1,128)}', space=vmem, size = 0x12000, scoped, tag = 'internal scratch']
  %s0 = inlined_call_operand.vmem [shape: f32[8], index: 0, kind: input, shape index: {}]
  %s1 = inlined_call_operand.vmem [shape: s32[16,1], index: 1, kind: input, shape index: {}]
  %s2 = inlined_call_operand.vmem [shape: f32[64,32], index: 2, kind: input, shape index: {}]
  %s3 = inlined_call_operand.vmem [shape: f32[16,32], index: 3, kind: input, shape index: {}]
  %s4 = inlined_call_operand.vmem [shape: f32[2,1,32], index: 4, kind: input, shape index: {}]
  %s5 = inlined_call_operand.vmem [shape: f32[2,1,32], index: 5, kind: input, shape index: {}]
  %s6 = inlined_call_operand.vmem [shape: f32[1,32], index: 6, kind: input, shape index: {}]
  %s7 = inlined_call_operand.vmem [shape: bf16[2,32,96], index: 7, kind: input, shape index: {}]
  %s8 = inlined_call_operand.vmem [shape: bf16[2,32,32], index: 8, kind: input, shape index: {}]
  %s9 = inlined_call_operand.vmem [shape: bf16[2,32,128], index: 9, kind: input, shape index: {}]
  %s10 = inlined_call_operand.vmem [shape: bf16[2,128,32], index: 10, kind: input, shape index: {}]
  %s11 = inlined_call_operand.vmem [shape: f32[32,64], index: 11, kind: input, shape index: {}]
  %s12 = inlined_call_operand.hbm [shape: f32[2,1,64], index: 12, kind: output, shape index: {}]
  %s13 = sld [smem:[#allocation0]]
  $region85: #{forward.1} parent=0
    _
  %s15 = ssub.s32 1, %s13
  %s16 = scalar_select 0, %s15, %s13
  $region1: #{forward.1} parent=0
    #allocation2 [shape = 'u8[512]{0}', space=smem, size = 0x200, scoped, tag = 'input window, operand 0, single buffered']
    #allocation3 [shape = 's32[2]{0}', space=sflag, size = 0x8, scoped, tag = 'scoped memory for forward.1']
    #allocation4 [shape = 's32[2]{0}', space=sflag, size = 0x8, scoped, tag = 'scoped memory for forward.1']
    #allocation5 [shape = 'u8[1024]{0}', space=vmem, size = 0x400, scoped, tag = 'output window, operand 0']
    %17 = vsyncpa [#allocation4], 0
    %18 = vsyncpa [#allocation3], 0
    %s19 = scalar_lea.sflag [#allocation3], 1
    %20 = vsyncpa %s19, 0
    loop: start=0, step=1, limit=4
    $region2: #{forward.1} parent=1 // loop_pre_header
      _
    $region3: #{forward.1} parent=1 // loop_header
      %s22 = sphi 0, %s26
      %p23 = scmp.ge.s32.totalorder %s22, 4
      %s30 = sphi 0, %s30
      %s32 = sphi 0, %s30
      %s33 = sphi 0, %s32
      %s47 = sphi 0, %s33
      %s53 = sphi 0, %s55
      %s56 = sphi 0, %s53
      %s57 = sphi 0, %s56
      %s73 = sphi 0, %s57
      %s77 = sphi 0, %s77
      %s79 = sphi 0, %s77
      %s80 = sphi 0, %s79
      %s94 = sphi 0, %s80
      %s98 = sphi 0, %s98
      %s100 = sphi 0, %s98
      %s101 = sphi 0, %s100
      %s115 = sphi 0, %s101
      %s119 = sphi 0, %s119
      %s121 = sphi 0, %s119
      %s122 = sphi 0, %s121
      %s136 = sphi 0, %s122
      %s140 = sphi 0, %s140
      %s142 = sphi 0, %s140
      %s143 = sphi 0, %s142
      %s157 = sphi 0, %s143
      %s161 = sphi 0, %s161
      %s163 = sphi 0, %s161
      %s164 = sphi 0, %s163
      %s178 = sphi 0, %s164
      %s182 = sphi 0, %s182
      %s184 = sphi 0, %s182
      %s185 = sphi 0, %s184
      %s199 = sphi 0, %s185
      %s203 = sphi 0, %s203
      %s205 = sphi 0, %s203
      %s206 = sphi 0, %s205
      %s220 = sphi 0, %s206
      %s224 = sphi 0, %s224
      %s226 = sphi 0, %s224
      %s227 = sphi 0, %s226
      %s241 = sphi 0, %s227
      %s245 = sphi 0, %s245
      %s247 = sphi 0, %s245
      %s248 = sphi 0, %s247
      %s262 = sphi 0, %s248
      %s266 = sphi 0, %s266
      %s268 = sphi 0, %s266
      %s269 = sphi 0, %s268
      %s283 = sphi 0, %s269
      %s289 = sphi 0, %s291
      %s292 = sphi 0, %s289
      %s293 = sphi 0, %s292
      %s309 = sphi 0, %s293
    $region4: #{forward.1} parent=1 // loop_header_branch
      %25 = sbr.rel (%p23) target = $region8
    $region5: #{forward.1} parent=1 // loop_body
      %s27 = ssub.s32 %s22, 1
      %s28 = ssub.s32 %s22, 2
      %s29 = sadd.s32 %s22, 1
      %s31 = sadd.s32 %s30, 1
      %p34 = scmp.eq.s32.totalorder %s22, 1
      %p35 = scmp.ne.s32.totalorder %s30, %s32
      %p36 = scmp.eq.s32.totalorder %s22, 0
      %p37 = por %p35, %p36
      %p38 = scmp.ne.s32.totalorder %s30, %s32
      %p39 = scmp.eq.s32.totalorder %s27, 1
      %p40 = por %p38, %p39
      %p41 = scmp.ne.s32.totalorder %s32, %s33
      %p42 = scmp.eq.s32.totalorder %s27, 0
      %p43 = por %p41, %p42
      %p44 = scmp.ne.s32.totalorder %s32, %s33
      %p45 = scmp.eq.s32.totalorder %s28, 1
      %p46 = por %p44, %p45
      %p48 = scmp.ne.s32.totalorder %s33, %s47
      %p49 = scmp.eq.s32.totalorder %s28, 0
      %p50 = por %p48, %p49
      %s51 = ssub.s32 %s22, %s29
      %p52 = scmp.eq.s32.totalorder %s51, 0
      %s54 = sadd.s32 %s53, 1
      %s55 = scalar_select %p52, %s53, %s54
      %p58 = pneg %p52
      %p59 = scmp.eq.s32.totalorder %s22, 1
      %p60 = por %p58, %p59
      %p61 = scmp.ne.s32.totalorder %s53, %s56
      %p62 = scmp.eq.s32.totalorder %s22, 0
      %p63 = por %p61, %p62
      %p64 = scmp.ne.s32.totalorder %s53, %s56
      %p65 = scmp.eq.s32.totalorder %s27, 1
      %p66 = por %p64, %p65
      %p67 = scmp.ne.s32.totalorder %s56, %s57
      %p68 = scmp.eq.s32.totalorder %s27, 0
      %p69 = por %p67, %p68
      %p70 = scmp.ne.s32.totalorder %s56, %s57
      %p71 = scmp.eq.s32.totalorder %s28, 1
      %p72 = por %p70, %p71
      %p74 = scmp.ne.s32.totalorder %s57, %s73
      %p75 = scmp.eq.s32.totalorder %s28, 0
      %p76 = por %p74, %p75
      %s78 = sadd.s32 %s77, 1
      %p81 = scmp.eq.s32.totalorder %s22, 1
      %p82 = scmp.ne.s32.totalorder %s77, %s79
      %p83 = scmp.eq.s32.totalorder %s22, 0
      %p84 = por %p82, %p83
      %p85 = scmp.ne.s32.totalorder %s77, %s79
      %p86 = scmp.eq.s32.totalorder %s27, 1
      %p87 = por %p85, %p86
      %p88 = scmp.ne.s32.totalorder %s79, %s80
      %p89 = scmp.eq.s32.totalorder %s27, 0
      %p90 = por %p88, %p89
      %p91 = scmp.ne.s32.totalorder %s79, %s80
      %p92 = scmp.eq.s32.totalorder %s28, 1
      %p93 = por %p91, %p92
      %p95 = scmp.ne.s32.totalorder %s80, %s94
      %p96 = scmp.eq.s32.totalorder %s28, 0
      %p97 = por %p95, %p96
      %s99 = sadd.s32 %s98, 1
      %p102 = scmp.eq.s32.totalorder %s22, 1
      %p103 = scmp.ne.s32.totalorder %s98, %s100
      %p104 = scmp.eq.s32.totalorder %s22, 0
      %p105 = por %p103, %p104
      %p106 = scmp.ne.s32.totalorder %s98, %s100
      %p107 = scmp.eq.s32.totalorder %s27, 1
      %p108 = por %p106, %p107
      %p109 = scmp.ne.s32.totalorder %s100, %s101
      %p110 = scmp.eq.s32.totalorder %s27, 0
      %p111 = por %p109, %p110
      %p112 = scmp.ne.s32.totalorder %s100, %s101
      %p113 = scmp.eq.s32.totalorder %s28, 1
      %p114 = por %p112, %p113
      %p116 = scmp.ne.s32.totalorder %s101, %s115
      %p117 = scmp.eq.s32.totalorder %s28, 0
      %p118 = por %p116, %p117
      %s120 = sadd.s32 %s119, 1
      %p123 = scmp.eq.s32.totalorder %s22, 1
      %p124 = scmp.ne.s32.totalorder %s119, %s121
      %p125 = scmp.eq.s32.totalorder %s22, 0
      %p126 = por %p124, %p125
      %p127 = scmp.ne.s32.totalorder %s119, %s121
      %p128 = scmp.eq.s32.totalorder %s27, 1
      %p129 = por %p127, %p128
      %p130 = scmp.ne.s32.totalorder %s121, %s122
      %p131 = scmp.eq.s32.totalorder %s27, 0
      %p132 = por %p130, %p131
      %p133 = scmp.ne.s32.totalorder %s121, %s122
      %p134 = scmp.eq.s32.totalorder %s28, 1
      %p135 = por %p133, %p134
      %p137 = scmp.ne.s32.totalorder %s122, %s136
      %p138 = scmp.eq.s32.totalorder %s28, 0
      %p139 = por %p137, %p138
      %s141 = sadd.s32 %s140, 1
      %p144 = scmp.eq.s32.totalorder %s22, 1
      %p145 = scmp.ne.s32.totalorder %s140, %s142
      %p146 = scmp.eq.s32.totalorder %s22, 0
      %p147 = por %p145, %p146
      %p148 = scmp.ne.s32.totalorder %s140, %s142
      %p149 = scmp.eq.s32.totalorder %s27, 1
      %p150 = por %p148, %p149
      %p151 = scmp.ne.s32.totalorder %s142, %s143
      %p152 = scmp.eq.s32.totalorder %s27, 0
      %p153 = por %p151, %p152
      %p154 = scmp.ne.s32.totalorder %s142, %s143
      %p155 = scmp.eq.s32.totalorder %s28, 1
      %p156 = por %p154, %p155
      %p158 = scmp.ne.s32.totalorder %s143, %s157
      %p159 = scmp.eq.s32.totalorder %s28, 0
      %p160 = por %p158, %p159
      %s162 = sadd.s32 %s161, 1
      %p165 = scmp.eq.s32.totalorder %s22, 1
      %p166 = scmp.ne.s32.totalorder %s161, %s163
      %p167 = scmp.eq.s32.totalorder %s22, 0
      %p168 = por %p166, %p167
      %p169 = scmp.ne.s32.totalorder %s161, %s163
      %p170 = scmp.eq.s32.totalorder %s27, 1
      %p171 = por %p169, %p170
      %p172 = scmp.ne.s32.totalorder %s163, %s164
      %p173 = scmp.eq.s32.totalorder %s27, 0
      %p174 = por %p172, %p173
      %p175 = scmp.ne.s32.totalorder %s163, %s164
      %p176 = scmp.eq.s32.totalorder %s28, 1
      %p177 = por %p175, %p176
      %p179 = scmp.ne.s32.totalorder %s164, %s178
      %p180 = scmp.eq.s32.totalorder %s28, 0
      %p181 = por %p179, %p180
      %s183 = sadd.s32 %s182, 1
      %p186 = scmp.eq.s32.totalorder %s22, 1
      %p187 = scmp.ne.s32.totalorder %s182, %s184
      %p188 = scmp.eq.s32.totalorder %s22, 0
      %p189 = por %p187, %p188
      %p190 = scmp.ne.s32.totalorder %s182, %s184
      %p191 = scmp.eq.s32.totalorder %s27, 1
      %p192 = por %p190, %p191
      %p193 = scmp.ne.s32.totalorder %s184, %s185
      %p194 = scmp.eq.s32.totalorder %s27, 0
      %p195 = por %p193, %p194
      %p196 = scmp.ne.s32.totalorder %s184, %s185
      %p197 = scmp.eq.s32.totalorder %s28, 1
      %p198 = por %p196, %p197
      %p200 = scmp.ne.s32.totalorder %s185, %s199
      %p201 = scmp.eq.s32.totalorder %s28, 0
      %p202 = por %p200, %p201
      %s204 = sadd.s32 %s203, 1
      %p207 = scmp.eq.s32.totalorder %s22, 1
      %p208 = scmp.ne.s32.totalorder %s203, %s205
      %p209 = scmp.eq.s32.totalorder %s22, 0
      %p210 = por %p208, %p209
      %p211 = scmp.ne.s32.totalorder %s203, %s205
      %p212 = scmp.eq.s32.totalorder %s27, 1
      %p213 = por %p211, %p212
      %p214 = scmp.ne.s32.totalorder %s205, %s206
      %p215 = scmp.eq.s32.totalorder %s27, 0
      %p216 = por %p214, %p215
      %p217 = scmp.ne.s32.totalorder %s205, %s206
      %p218 = scmp.eq.s32.totalorder %s28, 1
      %p219 = por %p217, %p218
      %p221 = scmp.ne.s32.totalorder %s206, %s220
      %p222 = scmp.eq.s32.totalorder %s28, 0
      %p223 = por %p221, %p222
      %s225 = sadd.s32 %s224, 1
      %p228 = scmp.eq.s32.totalorder %s22, 1
      %p229 = scmp.ne.s32.totalorder %s224, %s226
      %p230 = scmp.eq.s32.totalorder %s22, 0
      %p231 = por %p229, %p230
      %p232 = scmp.ne.s32.totalorder %s224, %s226
      %p233 = scmp.eq.s32.totalorder %s27, 1
      %p234 = por %p232, %p233
      %p235 = scmp.ne.s32.totalorder %s226, %s227
      %p236 = scmp.eq.s32.totalorder %s27, 0
      %p237 = por %p235, %p236
      %p238 = scmp.ne.s32.totalorder %s226, %s227
      %p239 = scmp.eq.s32.totalorder %s28, 1
      %p240 = por %p238, %p239
      %p242 = scmp.ne.s32.totalorder %s227, %s241
      %p243 = scmp.eq.s32.totalorder %s28, 0
      %p244 = por %p242, %p243
      %s246 = sadd.s32 %s245, 1
      %p249 = scmp.eq.s32.totalorder %s22, 1
      %p250 = scmp.ne.s32.totalorder %s245, %s247
      %p251 = scmp.eq.s32.totalorder %s22, 0
      %p252 = por %p250, %p251
      %p253 = scmp.ne.s32.totalorder %s245, %s247
      %p254 = scmp.eq.s32.totalorder %s27, 1
      %p255 = por %p253, %p254
      %p256 = scmp.ne.s32.totalorder %s247, %s248
      %p257 = scmp.eq.s32.totalorder %s27, 0
      %p258 = por %p256, %p257
      %p259 = scmp.ne.s32.totalorder %s247, %s248
      %p260 = scmp.eq.s32.totalorder %s28, 1
      %p261 = por %p259, %p260
      %p263 = scmp.ne.s32.totalorder %s248, %s262
      %p264 = scmp.eq.s32.totalorder %s28, 0
      %p265 = por %p263, %p264
      %s267 = sadd.s32 %s266, 1
      %p270 = scmp.eq.s32.totalorder %s22, 1
      %p271 = scmp.ne.s32.totalorder %s266, %s268
      %p272 = scmp.eq.s32.totalorder %s22, 0
      %p273 = por %p271, %p272
      %p274 = scmp.ne.s32.totalorder %s266, %s268
      %p275 = scmp.eq.s32.totalorder %s27, 1
      %p276 = por %p274, %p275
      %p277 = scmp.ne.s32.totalorder %s268, %s269
      %p278 = scmp.eq.s32.totalorder %s27, 0
      %p279 = por %p277, %p278
      %p280 = scmp.ne.s32.totalorder %s268, %s269
      %p281 = scmp.eq.s32.totalorder %s28, 1
      %p282 = por %p280, %p281
      %p284 = scmp.ne.s32.totalorder %s269, %s283
      %p285 = scmp.eq.s32.totalorder %s28, 0
      %p286 = por %p284, %p285
      %s287 = ssub.s32 %s22, %s29
      %p288 = scmp.eq.s32.totalorder %s287, 0
      %s290 = sadd.s32 %s289, 1
      %s291 = scalar_select %p288, %s289, %s290
      %p294 = pneg %p288
      %p295 = scmp.eq.s32.totalorder %s22, 1
      %p296 = por %p294, %p295
      %p297 = scmp.ne.s32.totalorder %s289, %s292
      %p298 = scmp.eq.s32.totalorder %s22, 0
      %p299 = por %p297, %p298
      %p300 = scmp.ne.s32.totalorder %s289, %s292
      %p301 = scmp.eq.s32.totalorder %s27, 1
      %p302 = por %p300, %p301
      %p303 = scmp.ne.s32.totalorder %s292, %s293
      %p304 = scmp.eq.s32.totalorder %s27, 0
      %p305 = por %p303, %p304
      %p306 = scmp.ne.s32.totalorder %s292, %s293
      %p307 = scmp.eq.s32.totalorder %s28, 1
      %p308 = por %p306, %p307
      %p310 = scmp.ne.s32.totalorder %s293, %s309
      %p311 = scmp.eq.s32.totalorder %s28, 0
      %p312 = por %p310, %p311
      %p313 = scmp.le.s32.totalorder 1, %s22
      %p314 = scmp.lt.s32.totalorder %s22, 3
      %p315 = pnand %p313, %p314
      %p316 = pneg %p315
      // Predicated region
      $region9: #{forward.1} parent=5 // pred_check
        _
      $region10: #{forward.1} parent=5 // pred_check_branch
        %318 = sbr.rel (%p315) target = $region12
      $region11: #{forward.1} parent=5 // pred_region
        %s319 = ssub.s32 %s22, 1
        // Predicated region
        $region13: #{forward.1} parent=11 // pred_check
          %p320 = pneg %p43
        $region14: #{forward.1} parent=11 // pred_check_branch
          %322 = sbr.rel (%p320) target = $region16
        $region15: #{forward.1} parent=11 // pred_region
          %s324 = ssub.s32 16, 16
          %325 = vsyncadd [#allocation4], %s324
          %s327 = sshll.u32 %s0, 4
          %s328 = int_to_ptr.vmem [resolvable:$true] %s327
          %330 = dma.vmem_to_smem %s328, 16, [#allocation2], [#allocation4]
        $region16: #{forward.1} parent=11 // pred_fallthru
          _
        // Predicated region
        $region17: #{forward.1} parent=11 // pred_check
          %p331 = pneg %p90
        $region18: #{forward.1} parent=11 // pred_check_branch
          %333 = sbr.rel (%p331) target = $region20
        $region19: #{forward.1} parent=11 // pred_region
          _
        $region20: #{forward.1} parent=11 // pred_fallthru
          _
        // Predicated region
        $region21: #{forward.1} parent=11 // pred_check
          %p334 = pneg %p111
        $region22: #{forward.1} parent=11 // pred_check_branch
          %336 = sbr.rel (%p334) target = $region24
        $region23: #{forward.1} parent=11 // pred_region
          _
        $region24: #{forward.1} parent=11 // pred_fallthru
          _
        // Predicated region
        $region25: #{forward.1} parent=11 // pred_check
          %p337 = pneg %p132
        $region26: #{forward.1} parent=11 // pred_check_branch
          %339 = sbr.rel (%p337) target = $region28
        $region27: #{forward.1} parent=11 // pred_region
          _
        $region28: #{forward.1} parent=11 // pred_fallthru
          _
        // Predicated region
        $region29: #{forward.1} parent=11 // pred_check
          %p340 = pneg %p153
        $region30: #{forward.1} parent=11 // pred_check_branch
          %342 = sbr.rel (%p340) target = $region32
        $region31: #{forward.1} parent=11 // pred_region
          _
        $region32: #{forward.1} parent=11 // pred_fallthru
          _
        // Predicated region
        $region33: #{forward.1} parent=11 // pred_check
          %p343 = pneg %p174
        $region34: #{forward.1} parent=11 // pred_check_branch
          %345 = sbr.rel (%p343) target = $region36
        $region35: #{forward.1} parent=11 // pred_region
          _
        $region36: #{forward.1} parent=11 // pred_fallthru
          _
        // Predicated region
        $region37: #{forward.1} parent=11 // pred_check
          %p346 = pneg %p195
        $region38: #{forward.1} parent=11 // pred_check_branch
          %348 = sbr.rel (%p346) target = $region40
        $region39: #{forward.1} parent=11 // pred_region
          _
        $region40: #{forward.1} parent=11 // pred_fallthru
          _
        // Predicated region
        $region41: #{forward.1} parent=11 // pred_check
          %p349 = pneg %p216
        $region42: #{forward.1} parent=11 // pred_check_branch
          %351 = sbr.rel (%p349) target = $region44
        $region43: #{forward.1} parent=11 // pred_region
          _
        $region44: #{forward.1} parent=11 // pred_fallthru
          _
        // Predicated region
        $region45: #{forward.1} parent=11 // pred_check
          %p352 = pneg %p237
        $region46: #{forward.1} parent=11 // pred_check_branch
          %354 = sbr.rel (%p352) target = $region48
        $region47: #{forward.1} parent=11 // pred_region
          _
        $region48: #{forward.1} parent=11 // pred_fallthru
          _
        // Predicated region
        $region49: #{forward.1} parent=11 // pred_check
          %p355 = pneg %p258
        $region50: #{forward.1} parent=11 // pred_check_branch
          %357 = sbr.rel (%p355) target = $region52
        $region51: #{forward.1} parent=11 // pred_region
          _
        $region52: #{forward.1} parent=11 // pred_fallthru
          _
        // Predicated region
        $region53: #{forward.1} parent=11 // pred_check
          %p358 = pneg %p279
        $region54: #{forward.1} parent=11 // pred_check_branch
          %360 = sbr.rel (%p358) target = $region56
        $region55: #{forward.1} parent=11 // pred_region
          _
        $region56: #{forward.1} parent=11 // pred_fallthru
          _
      $region12: #{forward.1} parent=5 // pred_fallthru
        _
      %p361 = scmp.lt.s32.totalorder %s22, 2
      // Predicated region
      $region57: #{forward.1} parent=5 // pred_check
        %p362 = pneg %p361
      $region58: #{forward.1} parent=5 // pred_check_branch
        %364 = sbr.rel (%p362) target = $region60
      $region59: #{forward.1} parent=5 // pred_region
        // Predicated region
        $region61: #{forward.1} parent=59 // pred_check
          %p365 = pneg %p63
        $region62: #{forward.1} parent=59 // pred_check_branch
          %367 = sbr.rel (%p365) target = $region64
        $region63: #{forward.1} parent=59 // pred_region
          %p368 = scmp.lt.s32.totalorder %s22, 1
          %s369 = scalar_select %p368, %s22, 1
          %s370 = smul.addr %s369, 8
          %s371 = scalar_lea.vmem %s1, %s370
        $region64: #{forward.1} parent=59 // pred_fallthru
          _
      $region60: #{forward.1} parent=5 // pred_fallthru
        _
      %p372 = scmp.le.s32.totalorder 1, %s22
      %p373 = scmp.lt.s32.totalorder %s22, 3
      %p374 = pnand %p372, %p373
      %p375 = pneg %p374
      // Predicated region
      $region65: #{forward.1} parent=5 // pred_check
        _
      $region66: #{forward.1} parent=5 // pred_check_branch
        %377 = sbr.rel (%p374) target = $region68
      $region67: #{forward.1} parent=5 // pred_region
        %s378 = ssub.s32 %s22, 1
        // Predicated region
        $region69: #{forward.1} parent=67 // pred_check
          %p379 = pneg %p43
        $region70: #{forward.1} parent=67 // pred_check_branch
          %381 = sbr.rel (%p379) target = $region72
        $region71: #{forward.1} parent=67 // pred_region
          %382 = dma.done [#allocation4], 16
        $region72: #{forward.1} parent=67 // pred_fallthru
          _
        %383 = sfence
        %p384 = pneg %p43
        %p385 = pneg %p40
        %p386 = scmp.lt.s32.totalorder %s27, 1
        %s387 = scalar_select %p386, %s27, 1
        %s388 = smul.addr %s387, 8
        %s389 = scalar_lea.vmem %s1, %s388
        %p390 = pneg %p69
        %p391 = pneg %p66
        %p392 = pneg %p90
        %p393 = pneg %p87
        %p394 = pneg %p111
        %p395 = pneg %p108
        %p396 = pneg %p132
        %p397 = pneg %p129
        %p398 = pneg %p153
        %p399 = pneg %p150
        %p400 = pneg %p174
        %p401 = pneg %p171
        %p402 = pneg %p195
        %p403 = pneg %p192
        %p404 = pneg %p216
        %p405 = pneg %p213
        %p406 = pneg %p237
        %p407 = pneg %p234
        %p408 = pneg %p258
        %p409 = pneg %p255
        %p410 = pneg %p279
        %p411 = pneg %p276
        %p412 = pneg %p305
        %p413 = pneg %p302
        %s414 = sand.u32 %s292, 1
        %s415 = scalar_lea.sflag [#allocation3], %s414
        %s416 = sand.u32 %s292, 1
        %s417 = scalar_lea.vmem [#allocation5], %s416
        %p418 = scmp.lt.s32.totalorder %s27, 1
        %s419 = scalar_select %p418, %s27, 1
        %s420 = smul.addr %s419, 8
        %s421 = scalar_lea.vmem %s1, %s420
        %v423 = vld [vmem:[%s421] sm:$0xff]
        %v424 = vlaneseq
        %v425 = vand.u32 %v424, 127
        %426 = vset.pattern.permute.xlu0 0
        %427 = vperm.xlu0 %426, %v423
        %v428 = vpop.permute.xlu0 %427
        %vm429 = vcmp.eq.s32.totalorder %v425, %v428
        %v430 = vsel %vm429, 1.0, 0.0
        %v431 = vld [vmem:[%s2] sm:$0xff]
        %v432 = vld [vmem:[%s2 + $0x8] sm:$0xff]
        %v433 = vld [vmem:[%s2 + $0x10] sm:$0xff]
        %v434 = vld [vmem:[%s2 + $0x18] sm:$0xff]
        %v435 = vld [vmem:[%s2 + $0x20] sm:$0xff]
        %v436 = vld [vmem:[%s2 + $0x28] sm:$0xff]
        %v437 = vld [vmem:[%s2 + $0x30] sm:$0xff]
        %v438 = vld [vmem:[%s2 + $0x38] sm:$0xff]
        %v439 = vld [vmem:[%s3] sm:$0xff]
        %vm440 = vcmask 523264
        %v442 = vsel %vm440, %v430, 0
        %444 = vmatprep.subr.mxu0 0.0
        %445 = vmatpush1.msra.mxu0 0.0
        %446 = vmatprep.subr.mxu0 0.0
        %447 = vmatpush1.msra.mxu0 0.0
        %448 = vmatprep.subr.mxu0 0.0
        %449 = vmatpush1.msra.mxu0 0.0
        %450 = vmatprep.subr.mxu0 0.0
        %451 = vmatpush1.msra.mxu0 0.0
        %452 = vmatprep.subr.mxu0 0.0
        %453 = vmatpush1.msra.mxu0 0.0
        %454 = vmatprep.subr.mxu0 0.0
        %455 = vmatpush1.msra.mxu0 0.0
        %456 = vmatprep.subr.mxu0 0.0
        %457 = vmatpush1.msra.mxu0 0.0
        %458 = vmatprep.subr.mxu0 0.0
        %459 = vmatpush1.msra.mxu0 0.0
        %460 = vmatprep.subr.mxu0 0.0
        %461 = vmatpush1.msra.mxu0 %v438
        %462 = vmatprep.subr.mxu0 0.0
        %463 = vmatpush1.msra.mxu0 %v437
        %464 = vmatprep.subr.mxu0 0.0
        %465 = vmatpush1.msra.mxu0 %v436
        %466 = vmatprep.subr.mxu0 0.0
        %467 = vmatpush1.msra.mxu0 %v435
        %468 = vmatprep.subr.mxu0 0.0
        %469 = vmatpush1.msra.mxu0 %v434
        %470 = vmatprep.subr.mxu0 0.0
        %471 = vmatpush1.msra.mxu0 %v433
        %472 = vmatprep.subr.mxu0 0.0
        %473 = vmatpush1.msra.mxu0 %v432
        %474 = vmatprep.subr.mxu0 0.0
        %475 = vmatpush1.msra.mxu0 %v431
        %476 = vmatprep.subr.mxu0 0.0
        %477 = vmatpush2.msra.mxu0 0.0
        %478 = vmatprep.subr.mxu0 0.0
        %479 = vmatpush2.msra.mxu0 0.0
        %480 = vmatprep.subr.mxu0 0.0
        %481 = vmatpush2.msra.mxu0 0.0
        %482 = vmatprep.subr.mxu0 0.0
        %483 = vmatpush2.msra.mxu0 0.0
        %484 = vmatprep.subr.mxu0 0.0
        %485 = vmatpush2.msra.mxu0 0.0
        %486 = vmatprep.subr.mxu0 0.0
        %487 = vmatpush2.msra.mxu0 0.0
        %488 = vmatprep.subr.mxu0 0.0
        %489 = vmatpush2.msra.mxu0 0.0
        %490 = vmatprep.subr.mxu0 0.0
        %491 = vmatpush2.msra.mxu0 0.0
        %492 = vmatprep.subr.mxu0 0.0
        %493 = vmatpush2.msra.mxu0 0.0
        %494 = vmatprep.subr.mxu0 0.0
        %495 = vmatpush2.msra.mxu0 0.0
        %496 = vmatprep.subr.mxu0 0.0
        %497 = vmatpush2.msra.mxu0 0.0
        %498 = vmatprep.subr.mxu0 0.0
        %499 = vmatpush2.msra.mxu0 0.0
        %500 = vmatprep.subr.mxu0 0.0
        %501 = vmatpush2.msra.mxu0 0.0
        %502 = vmatprep.subr.mxu0 0.0
        %503 = vmatpush2.msra.mxu0 0.0
        %504 = vmatprep.subr.mxu0 0.0
        %505 = vmatpush2.msra.mxu0 0.0
        %506 = vmatprep.subr.mxu0 0.0
        %507 = vmatpush2.msra.mxu0 0.0
        %508 = vmatprep.mubr.f32.mxu0 0.0
        %509 = vmatmul.mubr.f32.gmra.mxu0 %v442
        %v510 = vpop.f32.mrf.mxu0
        %v511 = vadd.f32 %v439, %v510
        %v512 = vpop.f32.mrf.mxu0
        %513 = vdwg.mxu0
        %v514 = vand.u32 2147483647, %v511
        %vm515 = vcmask 261120
        %v516 = vsel %vm515, %v514, -inf
        %517 = vmax.xlane.f32.xlu0 %v516
        %v518 = vpop.xlane.xlu0 %517
        %v519 = vmax.f32 %v518, 1e-05
        %v520 = vrcp.pop %v519
        %v521 = vmul.f32 127.0, %v520
        %v522 = vmul.f32 %v511, %v521
        %v523 = vround.ne.pseudo %v522
        %v524 = vmul.f32 %v519, 0.007874016
        %v525 = vmul.f32 %v523, %v524
        %v526 = vlaneseq
        %v527 = vshrl.u32 %v526, 7
        %vm528 = vcmp.le.s32.totalorder %v425, %v527
        %s529 = sld [smem:[#allocation2]]
        %s530 = sld [smem:[#allocation2 + $0x1]]
        %s531 = sld [smem:[#allocation2 + $0x2]]
        %s532 = sld [smem:[#allocation2 + $0x3]]
        %v533 = vld [vmem:[%s7] sm:$0xf]
        %v534 = vld [vmem:[%s7 + $0x4] sm:$0xf]
        %v535 = vld [vmem:[%s7 + $0x8] sm:$0xf]
        %v536 = vld [vmem:[%s7 + $0xc] sm:$0xf]
        %v537 = vld [vmem:[%s8] sm:$0xf]
        %v538 = vld [vmem:[%s8 + $0x4] sm:$0xf]
        %v539 = vld [vmem:[%s8 + $0x8] sm:$0xf]
        %v540 = vld [vmem:[%s8 + $0xc] sm:$0xf]
        %v541 = vld [vmem:[%s9] sm:$0xf]
        %v542 = vld [vmem:[%s9 + $0x4] sm:$0xf]
        %v543 = vld [vmem:[%s9 + $0x8] sm:$0xf]
        %v544 = vld [vmem:[%s9 + $0xc] sm:$0xf]
        %v545 = vld [vmem:[%s10] sm:$0xf]
        %v546 = vld [vmem:[%s10 + $0x4] sm:$0xf]
        %v547 = vld [vmem:[%s10 + $0x8] sm:$0xf]
        %v548 = vld [vmem:[%s10 + $0xc] sm:$0xf]
        %v549 = vld [vmem:[%s10 + $0x10] sm:$0xf]
        %v550 = vld [vmem:[%s10 + $0x14] sm:$0xf]
        %v551 = vld [vmem:[%s10 + $0x18] sm:$0xf]
        %v552 = vld [vmem:[%s10 + $0x1c] sm:$0xf]
        %v553 = vld [vmem:[%s10 + $0x20] sm:$0xf]
        %v554 = vld [vmem:[%s10 + $0x24] sm:$0xf]
        %v555 = vld [vmem:[%s10 + $0x28] sm:$0xf]
        %v556 = vld [vmem:[%s10 + $0x2c] sm:$0xf]
        %v557 = vld [vmem:[%s10 + $0x30] sm:$0xf]
        %v558 = vld [vmem:[%s10 + $0x34] sm:$0xf]
        %v559 = vld [vmem:[%s10 + $0x38] sm:$0xf]
        %v560 = vld [vmem:[%s10 + $0x3c] sm:$0xf]
        %v561 = vld [vmem:[%s4] sm:$0x1]
        %v562 = vsel %vm515, %v525, 0.0
        %563 = vadd.xlane.f32.xlu0 %v562
        %v564 = vpop.xlane.xlu0 %563
        %v565 = vrcp.pop 32.0
        %v566 = vmul.f32 %v564, %v565
        %v567 = vsub.f32 %v525, %v566
        %v568 = vmul.f32 %v567, %v567
        %v569 = vsel %vm515, %v568, 0.0
        %570 = vadd.xlane.f32.xlu0 %v569
        %v571 = vpop.xlane.xlu0 %570
        %v572 = vmul.f32 %v571, %v565
        %v573 = vadd.f32 %v572, 1e-05
        %v574 = vrsqrt.pop %v573
        %v575 = vmul.f32 %v567, %v574
        %v577 = vlaneseq
        %v578 = vshrl.u32 %v577, 7
        %v579 = vsub.s32 0, %v578
        %v580 = vrot.slane %v561, %v579
        %v582 = vmul.f32 %v575, %v580
        %v583 = vand.u32 2147483647, %v582
        %v584 = vsel %vm515, %v583, -inf
        %585 = vmax.xlane.f32.xlu0 %v584
        %v586 = vpop.xlane.xlu0 %585
        %v587 = vmax.f32 %v586, 1e-05
        %v588 = vrcp.pop %v587
        %v589 = vmul.f32 127.0, %v588
        %v590 = vmul.f32 %v582, %v589
        %v591 = vround.ne.pseudo %v590
        %v592 = vmul.f32 %v587, 0.007874016
        %v593 = vpack.c.bf16 %v591, %v591
        %v598 = vunpack.c.l.b16 %v533
        %v599 = vunpack.c.l.b16 %v534
        %v600 = vunpack.c.l.b16 %v535
        %v601 = vunpack.c.l.b16 %v536
        %v602 = vpack.c.b16 %v599, %v598
        %v603 = vpack.c.b16 %v601, %v600
        %v607 = vsel %vm515, %v593, 0
        %609 = vmatprep.subr.bf16.mxu0 0
        %610 = vmatpush1.bf16.msra.mxu0 0
        %611 = vmatprep.subr.bf16.mxu0 0
        %612 = vmatpush1.bf16.msra.mxu0 0
        %613 = vmatprep.subr.bf16.mxu0 0
        %614 = vmatpush1.bf16.msra.mxu0 0
        %615 = vmatprep.subr.bf16.mxu0 0
        %616 = vmatpush1.bf16.msra.mxu0 0
        %617 = vmatprep.subr.bf16.mxu0 0
        %618 = vmatpush1.bf16.msra.mxu0 0
        %619 = vmatprep.subr.bf16.mxu0 0
        %620 = vmatpush1.bf16.msra.mxu0 0
        %621 = vmatprep.subr.bf16.mxu0 0
        %622 = vmatpush1.bf16.msra.mxu0 %v603
        %623 = vmatprep.subr.bf16.mxu0 0
        %624 = vmatpush1.bf16.msra.mxu0 %v602
        %625 = vmatprep.subr.bf16.mxu0 0
        %626 = vmatpush2.bf16.msra.mxu0 0
        %627 = vmatprep.subr.bf16.mxu0 0
        %628 = vmatpush2.bf16.msra.mxu0 0
        %629 = vmatprep.subr.bf16.mxu0 0
        %630 = vmatpush2.bf16.msra.mxu0 0
        %631 = vmatprep.subr.bf16.mxu0 0
        %632 = vmatpush2.bf16.msra.mxu0 0
        %633 = vmatprep.subr.bf16.mxu0 0
        %634 = vmatpush2.bf16.msra.mxu0 0
        %635 = vmatprep.subr.bf16.mxu0 0
        %636 = vmatpush2.bf16.msra.mxu0 0
        %637 = vmatprep.subr.bf16.mxu0 0
        %638 = vmatpush2.bf16.msra.mxu0 0
        %639 = vmatprep.subr.bf16.mxu0 0
        %640 = vmatpush2.bf16.msra.mxu0 0
        %641 = vmatprep.mubr.bf16.mxu0 0
        %642 = vmatmul.mubr.bf16.gmra.mxu0 %v607
        %v643 = vpop.f32.mrf.mxu0
        %v644 = vadd.f32 0.0, %v643
        %v645 = vpop.f32.mrf.mxu0
        %v646 = vpop.f32.mrf.mxu0
        %v647 = vpop.f32.mrf.mxu0
        %648 = vdwg.mxu0
        %v649 = vstv %s529
        %v650 = vmul.f32 %v592, %v649
        %v651 = vmul.f32 %v644, %v650
        %v652 = vpack.c.bf16 %v651, %v651
        %654 = vrot.lane.b32.xlu0 %v652, 96
        %v655 = vpop.permute.xlu0 %654
        %vm656 = vcmask 130048
        %v658 = vsel %vm656, %v652, 0
        %v661 = vsel %vm656, %v655, 0
        %663 = vmatprep.subr.bf16.mxu0 0
        %664 = vmatpush1.bf16.xpose.msra.mxu0 0
        %665 = vmatprep.subr.bf16.mxu0 0
        %666 = vmatpush1.bf16.xpose.msra.mxu0 0
        %667 = vmatprep.subr.bf16.mxu0 0
        %668 = vmatpush1.bf16.xpose.msra.mxu0 0
        %669 = vmatprep.subr.bf16.mxu0 0
        %670 = vmatpush1.bf16.xpose.msra.mxu0 0
        %671 = vmatprep.subr.bf16.mxu0 0
        %672 = vmatpush1.bf16.xpose.msra.mxu0 0
        %673 = vmatprep.subr.bf16.mxu0 0
        %674 = vmatpush1.bf16.xpose.msra.mxu0 0
        %675 = vmatprep.subr.bf16.mxu0 0
        %676 = vmatpush1.bf16.xpose.msra.mxu0 0
        %677 = vmatprep.subr.bf16.mxu0 0
        %678 = vmatpush1.bf16.xpose.msra.mxu0 %v661
        %679 = vmatprep.subr.bf16.mxu0 0
        %680 = vmatpush2.bf16.xpose.msra.mxu0 0
        %681 = vmatprep.subr.bf16.mxu0 0
        %682 = vmatpush2.bf16.xpose.msra.mxu0 0
        %683 = vmatprep.subr.bf16.mxu0 0
        %684 = vmatpush2.bf16.xpose.msra.mxu0 0
        %685 = vmatprep.subr.bf16.mxu0 0
        %686 = vmatpush2.bf16.xpose.msra.mxu0 0
        %687 = vmatprep.subr.bf16.mxu0 0
        %688 = vmatpush2.bf16.xpose.msra.mxu0 0
        %689 = vmatprep.subr.bf16.mxu0 0
        %690 = vmatpush2.bf16.xpose.msra.mxu0 0
        %691 = vmatprep.subr.bf16.mxu0 0
        %692 = vmatpush2.bf16.xpose.msra.mxu0 0
        %693 = vmatprep.subr.bf16.mxu0 0
        %694 = vmatpush2.bf16.xpose.msra.mxu0 0
        %695 = vmatprep.mubr.bf16.mxu0 0
        %696 = vmatmul.mubr.bf16.gmra.mxu0 %v658
        %v697 = vpop.f32.mrf.mxu0
        %v698 = vadd.f32 0.0, %v697
        %v699 = vpop.f32.mrf.mxu0
        %v700 = vpop.f32.mrf.mxu0
        %v701 = vpop.f32.mrf.mxu0
        %702 = vdwg.mxu0
        %v703 = vmul.f32 %v698, 0.25
        %v704 = vsel %vm528, %v703, -inf
        %vm705 = vcmask 64512
        %v706 = vsel %vm705, %v704, -inf
        %707 = vmax.xlane.f32.xlu0 %v706
        %v708 = vpop.xlane.xlu0 %707
        %v709 = vsub.f32 %v704, %v708
        %v710 = vmul.f32 %v709, 1.442695
        %v711 = vpow.pop %v710
        %v712 = vsel %vm705, %v711, 0.0
        %713 = vadd.xlane.f32.xlu0 %v712
        %v714 = vpop.xlane.xlu0 %713
        %v715 = vrcp.pop %v714
        %v716 = vmul.f32 %v711, %v715
        %v717 = vpack.c.bf16 %v716, %v716
        %718 = vrot.lane.b32.xlu0 %v652, 64
        %v719 = vpop.permute.xlu0 %718
        %v721 = vsel %vm705, %v717, 0
        %vm723 = vcmask 1043456
        %v725 = vsel %vm723, %v719, 0
        %727 = vmatprep.subr.bf16.mxu0 0
        %728 = vmatpush1.bf16.msra.mxu0 0
        %729 = vmatprep.subr.bf16.mxu0 0
        %730 = vmatpush1.bf16.msra.mxu0 0
        %731 = vmatprep.subr.bf16.mxu0 0
        %732 = vmatpush1.bf16.msra.mxu0 0
        %733 = vmatprep.subr.bf16.mxu0 0
        %734 = vmatpush1.bf16.msra.mxu0 0
        %735 = vmatprep.subr.bf16.mxu0 0
        %736 = vmatpush1.bf16.msra.mxu0 0
        %737 = vmatprep.subr.bf16.mxu0 0
        %738 = vmatpush1.bf16.msra.mxu0 0
        %739 = vmatprep.subr.bf16.mxu0 0
        %740 = vmatpush1.bf16.msra.mxu0 0
        %741 = vmatprep.subr.bf16.mxu0 0
        %742 = vmatpush1.bf16.msra.mxu0 %v725
        %743 = vmatprep.subr.bf16.mxu0 0
        %744 = vmatpush2.bf16.msra.mxu0 0
        %745 = vmatprep.subr.bf16.mxu0 0
        %746 = vmatpush2.bf16.msra.mxu0 0
        %747 = vmatprep.subr.bf16.mxu0 0
        %748 = vmatpush2.bf16.msra.mxu0 0
        %749 = vmatprep.subr.bf16.mxu0 0
        %750 = vmatpush2.bf16.msra.mxu0 0
        %751 = vmatprep.subr.bf16.mxu0 0
        %752 = vmatpush2.bf16.msra.mxu0 0
        %753 = vmatprep.subr.bf16.mxu0 0
        %754 = vmatpush2.bf16.msra.mxu0 0
        %755 = vmatprep.subr.bf16.mxu0 0
        %756 = vmatpush2.bf16.msra.mxu0 0
        %757 = vmatprep.subr.bf16.mxu0 0
        %758 = vmatpush2.bf16.msra.mxu0 0
        %759 = vmatprep.mubr.bf16.mxu0 0
        %760 = vmatmul.mubr.bf16.gmra.mxu0 %v721
        %v761 = vpop.f32.mrf.mxu0
        %v762 = vadd.f32 0.0, %v761
        %v763 = vpop.f32.mrf.mxu0
        %v764 = vpop.f32.mrf.mxu0
        %v765 = vpop.f32.mrf.mxu0
        %766 = vdwg.mxu0
        %767 = vrot.lane.b32.xlu0 %v652, 112
        %v768 = vpop.permute.xlu0 %767
        %769 = vrot.lane.b32.xlu0 %v652, 80
        %v770 = vpop.permute.xlu0 %769
        %v772 = vsel %vm656, %v768, 0
        %v775 = vsel %vm656, %v770, 0
        %777 = vmatprep.subr.bf16.mxu0 0
        %778 = vmatpush1.bf16.xpose.msra.mxu0 0
        %779 = vmatprep.subr.bf16.mxu0 0
        %780 = vmatpush1.bf16.xpose.msra.mxu0 0
        %781 = vmatprep.subr.bf16.mxu0 0
        %782 = vmatpush1.bf16.xpose.msra.mxu0 0
        %783 = vmatprep.subr.bf16.mxu0 0
        %784 = vmatpush1.bf16.xpose.msra.mxu0 0
        %785 = vmatprep.subr.bf16.mxu0 0
        %786 = vmatpush1.bf16.xpose.msra.mxu0 0
        %787 = vmatprep.subr.bf16.mxu0 0
        %788 = vmatpush1.bf16.xpose.msra.mxu0 0
        %789 = vmatprep.subr.bf16.mxu0 0
        %790 = vmatpush1.bf16.xpose.msra.mxu0 0
        %791 = vmatprep.subr.bf16.mxu0 0
        %792 = vmatpush1.bf16.xpose.msra.mxu0 %v775
        %793 = vmatprep.subr.bf16.mxu0 0
        %794 = vmatpush2.bf16.xpose.msra.mxu0 0
        %795 = vmatprep.subr.bf16.mxu0 0
        %796 = vmatpush2.bf16.xpose.msra.mxu0 0
        %797 = vmatprep.subr.bf16.mxu0 0
        %798 = vmatpush2.bf16.xpose.msra.mxu0 0
        %799 = vmatprep.subr.bf16.mxu0 0
        %800 = vmatpush2.bf16.xpose.msra.mxu0 0
        %801 = vmatprep.subr.bf16.mxu0 0
        %802 = vmatpush2.bf16.xpose.msra.mxu0 0
        %803 = vmatprep.subr.bf16.mxu0 0
        %804 = vmatpush2.bf16.xpose.msra.mxu0 0
        %805 = vmatprep.subr.bf16.mxu0 0
        %806 = vmatpush2.bf16.xpose.msra.mxu0 0
        %807 = vmatprep.subr.bf16.mxu0 0
        %808 = vmatpush2.bf16.xpose.msra.mxu0 0
        %809 = vmatprep.mubr.bf16.mxu0 0
        %810 = vmatmul.mubr.bf16.gmra.mxu0 %v772
        %v811 = vpop.f32.mrf.mxu0
        %v812 = vadd.f32 0.0, %v811
        %v813 = vpop.f32.mrf.mxu0
        %v814 = vpop.f32.mrf.mxu0
        %v815 = vpop.f32.mrf.mxu0
        %816 = vdwg.mxu0
        %v817 = vmul.f32 %v812, 0.25
        %v818 = vsel %vm528, %v817, -inf
        %v819 = vsel %vm705, %v818, -inf
        %820 = vmax.xlane.f32.xlu0 %v819
        %v821 = vpop.xlane.xlu0 %820
        %v822 = vsub.f32 %v818, %v821
        %v823 = vmul.f32 %v822, 1.442695
        %v824 = vpow.pop %v823
        %v825 = vsel %vm705, %v824, 0.0
        %826 = vadd.xlane.f32.xlu0 %v825
        %v827 = vpop.xlane.xlu0 %826
        %v828 = vrcp.pop %v827
        %v829 = vmul.f32 %v824, %v828
        %v830 = vpack.c.bf16 %v829, %v829
        %831 = vrot.lane.b32.xlu0 %v652, 48
        %v832 = vpop.permute.xlu0 %831
        %v834 = vsel %vm705, %v830, 0
        %v837 = vsel %vm723, %v832, 0
        %839 = vmatprep.subr.bf16.mxu0 0
        %840 = vmatpush1.bf16.msra.mxu0 0
        %841 = vmatprep.subr.bf16.mxu0 0
        %842 = vmatpush1.bf16.msra.mxu0 0
        %843 = vmatprep.subr.bf16.mxu0 0
        %844 = vmatpush1.bf16.msra.mxu0 0
        %845 = vmatprep.subr.bf16.mxu0 0
        %846 = vmatpush1.bf16.msra.mxu0 0
        %847 = vmatprep.subr.bf16.mxu0 0
        %848 = vmatpush1.bf16.msra.mxu0 0
        %849 = vmatprep.subr.bf16.mxu0 0
        %850 = vmatpush1.bf16.msra.mxu0 0
        %851 = vmatprep.subr.bf16.mxu0 0
        %852 = vmatpush1.bf16.msra.mxu0 0
        %853 = vmatprep.subr.bf16.mxu0 0
        %854 = vmatpush1.bf16.msra.mxu0 %v837
        %855 = vmatprep.subr.bf16.mxu0 0
        %856 = vmatpush2.bf16.msra.mxu0 0
        %857 = vmatprep.subr.bf16.mxu0 0
        %858 = vmatpush2.bf16.msra.mxu0 0
        %859 = vmatprep.subr.bf16.mxu0 0
        %860 = vmatpush2.bf16.msra.mxu0 0
        %861 = vmatprep.subr.bf16.mxu0 0
        %862 = vmatpush2.bf16.msra.mxu0 0
        %863 = vmatprep.subr.bf16.mxu0 0
        %864 = vmatpush2.bf16.msra.mxu0 0
        %865 = vmatprep.subr.bf16.mxu0 0
        %866 = vmatpush2.bf16.msra.mxu0 0
        %867 = vmatprep.subr.bf16.mxu0 0
        %868 = vmatpush2.bf16.msra.mxu0 0
        %869 = vmatprep.subr.bf16.mxu0 0
        %870 = vmatpush2.bf16.msra.mxu0 0
        %871 = vmatprep.mubr.bf16.mxu0 0
        %872 = vmatmul.mubr.bf16.gmra.mxu0 %v834
        %v873 = vpop.f32.mrf.mxu0
        %v874 = vadd.f32 0.0, %v873
        %v875 = vpop.f32.mrf.mxu0
        %v876 = vpop.f32.mrf.mxu0
        %v877 = vpop.f32.mrf.mxu0
        %878 = vdwg.mxu0
        %v879 = vand.u32 2147483647, %v762
        %v880 = vsel %vm656, %v879, -inf
        %881 = vmax.xlane.f32.xlu0 %v880
        %v882 = vpop.xlane.xlu0 %881
        %v883 = vmax.f32 %v882, 1e-05
        %v884 = vand.u32 2147483647, %v874
        %v885 = vsel %vm656, %v884, -inf
        %886 = vmax.xlane.f32.xlu0 %v885
        %v887 = vpop.xlane.xlu0 %886
        %v888 = vmax.f32 %v883, %v887
        %v889 = vrcp.pop %v888
        %v890 = vmul.f32 127.0, %v889
        %v891 = vmul.f32 %v762, %v890
        %v892 = vround.ne.pseudo %v891
        %v893 = vpack.c.bf16 %v892, %v892
        %v894 = vmul.f32 %v874, %v890
        %v895 = vround.ne.pseudo %v894
        %v896 = vpack.c.bf16 %v895, %v895
        %v899 = vunpack.c.l.b16 %v539
        %v900 = vunpack.c.l.b16 %v540
        %v901 = vpack.c.b16 %v900, %v899
        %v904 = vsel %vm656, %v896, 0
        %906 = vmatprep.subr.bf16.mxu0 0
        %907 = vmatpush1.bf16.msra.mxu0 0
        %908 = vmatprep.subr.bf16.mxu0 0
        %909 = vmatpush1.bf16.msra.mxu0 0
        %910 = vmatprep.subr.bf16.mxu0 0
        %911 = vmatpush1.bf16.msra.mxu0 0
        %912 = vmatprep.subr.bf16.mxu0 0
        %913 = vmatpush1.bf16.msra.mxu0 0
        %914 = vmatprep.subr.bf16.mxu0 0
        %915 = vmatpush1.bf16.msra.mxu0 0
        %916 = vmatprep.subr.bf16.mxu0 0
        %917 = vmatpush1.bf16.msra.mxu0 0
        %918 = vmatprep.subr.bf16.mxu0 0
        %919 = vmatpush1.bf16.msra.mxu0 0
        %920 = vmatprep.subr.bf16.mxu0 0
        %921 = vmatpush1.bf16.msra.mxu0 %v901
        %922 = vmatprep.subr.bf16.mxu0 0
        %923 = vmatpush2.bf16.msra.mxu0 0
        %924 = vmatprep.subr.bf16.mxu0 0
        %925 = vmatpush2.bf16.msra.mxu0 0
        %926 = vmatprep.subr.bf16.mxu0 0
        %927 = vmatpush2.bf16.msra.mxu0 0
        %928 = vmatprep.subr.bf16.mxu0 0
        %929 = vmatpush2.bf16.msra.mxu0 0
        %930 = vmatprep.subr.bf16.mxu0 0
        %931 = vmatpush2.bf16.msra.mxu0 0
        %932 = vmatprep.subr.bf16.mxu0 0
        %933 = vmatpush2.bf16.msra.mxu0 0
        %934 = vmatprep.subr.bf16.mxu0 0
        %935 = vmatpush2.bf16.msra.mxu0 0
        %936 = vmatprep.subr.bf16.mxu0 0
        %937 = vmatpush2.bf16.msra.mxu0 0
        %938 = vmatprep.mubr.bf16.mxu0 0
        %939 = vmatmul.mubr.bf16.gmra.mxu0 %v904
        %v940 = vpop.f32.mrf.mxu0
        %v941 = vadd.f32 0.0, %v940
        %v942 = vpop.f32.mrf.mxu0
        %v943 = vpop.f32.mrf.mxu0
        %v944 = vpop.f32.mrf.mxu0
        %945 = vdwg.mxu0
        %v948 = vunpack.c.l.b16 %v537
        %v949 = vunpack.c.l.b16 %v538
        %v950 = vpack.c.b16 %v949, %v948
        %v953 = vsel %vm656, %v893, 0
        %955 = vmatprep.subr.bf16.mxu0 0
        %956 = vmatpush1.bf16.msra.mxu0 0
        %957 = vmatprep.subr.bf16.mxu0 0
        %958 = vmatpush1.bf16.msra.mxu0 0
        %959 = vmatprep.subr.bf16.mxu0 0
        %960 = vmatpush1.bf16.msra.mxu0 0
        %961 = vmatprep.subr.bf16.mxu0 0
        %962 = vmatpush1.bf16.msra.mxu0 0
        %963 = vmatprep.subr.bf16.mxu0 0
        %964 = vmatpush1.bf16.msra.mxu0 0
        %965 = vmatprep.subr.bf16.mxu0 0
        %966 = vmatpush1.bf16.msra.mxu0 0
        %967 = vmatprep.subr.bf16.mxu0 0
        %968 = vmatpush1.bf16.msra.mxu0 0
        %969 = vmatprep.subr.bf16.mxu0 0
        %970 = vmatpush1.bf16.msra.mxu0 %v950
        %971 = vmatprep.subr.bf16.mxu0 0
        %972 = vmatpush2.bf16.msra.mxu0 0
        %973 = vmatprep.subr.bf16.mxu0 0
        %974 = vmatpush2.bf16.msra.mxu0 0
        %975 = vmatprep.subr.bf16.mxu0 0
        %976 = vmatpush2.bf16.msra.mxu0 0
        %977 = vmatprep.subr.bf16.mxu0 0
        %978 = vmatpush2.bf16.msra.mxu0 0
        %979 = vmatprep.subr.bf16.mxu0 0
        %980 = vmatpush2.bf16.msra.mxu0 0
        %981 = vmatprep.subr.bf16.mxu0 0
        %982 = vmatpush2.bf16.msra.mxu0 0
        %983 = vmatprep.subr.bf16.mxu0 0
        %984 = vmatpush2.bf16.msra.mxu0 0
        %985 = vmatprep.subr.bf16.mxu0 0
        %986 = vmatpush2.bf16.msra.mxu0 0
        %987 = vmatprep.mubr.bf16.mxu0 0
        %988 = vmatmul.mubr.bf16.gmra.mxu0 %v953
        %v989 = vpop.f32.mrf.mxu0
        %v990 = vadd.f32 %v941, %v989
        %v991 = vpop.f32.mrf.mxu0
        %v992 = vpop.f32.mrf.mxu0
        %v993 = vpop.f32.mrf.mxu0
        %994 = vdwg.mxu0
        %v995 = vmul.f32 %v888, 0.007874016
        %v996 = vstv %s530
        %v997 = vmul.f32 %v995, %v996
        %v998 = vmul.f32 %v990, %v997
        %v999 = vadd.f32 %v525, %v998
        %v1000 = vld [vmem:[%s5] sm:$0x1]
        %v1001 = vsel %vm515, %v999, 0.0
        %1002 = vadd.xlane.f32.xlu0 %v1001
        %v1003 = vpop.xlane.xlu0 %1002
        %v1004 = vmul.f32 %v1003, %v565
        %v1005 = vsub.f32 %v999, %v1004
        %v1006 = vmul.f32 %v1005, %v1005
        %v1007 = vsel %vm515, %v1006, 0.0
        %1008 = vadd.xlane.f32.xlu0 %v1007
        %v1009 = vpop.xlane.xlu0 %1008
        %v1010 = vmul.f32 %v1009, %v565
        %v1011 = vadd.f32 %v1010, 1e-05
        %v1012 = vrsqrt.pop %v1011
        %v1013 = vmul.f32 %v1005, %v1012
        %v1015 = vlaneseq
        %v1016 = vshrl.u32 %v1015, 7
        %v1017 = vsub.s32 0, %v1016
        %v1018 = vrot.slane %v1000, %v1017
        %v1020 = vmul.f32 %v1013, %v1018
        %v1021 = vand.u32 2147483647, %v1020
        %v1022 = vsel %vm515, %v1021, -inf
        %1023 = vmax.xlane.f32.xlu0 %v1022
        %v1024 = vpop.xlane.xlu0 %1023
        %v1025 = vmax.f32 %v1024, 1e-05
        %v1026 = vrcp.pop %v1025
        %v1027 = vmul.f32 127.0, %v1026
        %v1028 = vmul.f32 %v1020, %v1027
        %v1029 = vround.ne.pseudo %v1028
        %v1030 = vmul.f32 %v1025, 0.007874016
        %v1031 = vpack.c.bf16 %v1029, %v1029
        %v1036 = vunpack.c.l.b16 %v541
        %v1037 = vunpack.c.l.b16 %v542
        %v1038 = vunpack.c.l.b16 %v543
        %v1039 = vunpack.c.l.b16 %v544
        %v1040 = vpack.c.b16 %v1037, %v1036
        %v1041 = vpack.c.b16 %v1039, %v1038
        %v1045 = vsel %vm515, %v1031, 0
        %1047 = vmatprep.subr.bf16.mxu0 0
        %1048 = vmatpush1.bf16.msra.mxu0 0
        %1049 = vmatprep.subr.bf16.mxu0 0
        %1050 = vmatpush1.bf16.msra.mxu0 0
        %1051 = vmatprep.subr.bf16.mxu0 0
        %1052 = vmatpush1.bf16.msra.mxu0 0
        %1053 = vmatprep.subr.bf16.mxu0 0
        %1054 = vmatpush1.bf16.msra.mxu0 0
        %1055 = vmatprep.subr.bf16.mxu0 0
        %1056 = vmatpush1.bf16.msra.mxu0 0
        %1057 = vmatprep.subr.bf16.mxu0 0
        %1058 = vmatpush1.bf16.msra.mxu0 0
        %1059 = vmatprep.subr.bf16.mxu0 0
        %1060 = vmatpush1.bf16.msra.mxu0 %v1041
        %1061 = vmatprep.subr.bf16.mxu0 0
        %1062 = vmatpush1.bf16.msra.mxu0 %v1040
        %1063 = vmatprep.subr.bf16.mxu0 0
        %1064 = vmatpush2.bf16.msra.mxu0 0
        %1065 = vmatprep.subr.bf16.mxu0 0
        %1066 = vmatpush2.bf16.msra.mxu0 0
        %1067 = vmatprep.subr.bf16.mxu0 0
        %1068 = vmatpush2.bf16.msra.mxu0 0
        %1069 = vmatprep.subr.bf16.mxu0 0
        %1070 = vmatpush2.bf16.msra.mxu0 0
        %1071 = vmatprep.subr.bf16.mxu0 0
        %1072 = vmatpush2.bf16.msra.mxu0 0
        %1073 = vmatprep.subr.bf16.mxu0 0
        %1074 = vmatpush2.bf16.msra.mxu0 0
        %1075 = vmatprep.subr.bf16.mxu0 0
        %1076 = vmatpush2.bf16.msra.mxu0 0
        %1077 = vmatprep.subr.bf16.mxu0 0
        %1078 = vmatpush2.bf16.msra.mxu0 0
        %1079 = vmatprep.mubr.bf16.mxu0 0
        %1080 = vmatmul.mubr.bf16.gmra.mxu0 %v1045
        %v1081 = vpop.f32.mrf.mxu0
        %v1082 = vadd.f32 0.0, %v1081
        %v1083 = vpop.f32.mrf.mxu0
        %v1084 = vpop.f32.mrf.mxu0
        %v1085 = vpop.f32.mrf.mxu0
        %1086 = vdwg.mxu0
        %v1087 = vstv %s531
        %v1088 = vmul.f32 %v1030, %v1087
        %v1089 = vmul.f32 %v1082, %v1088
        %v1090 = vmax.f32 %v1089, 0.0
        %v1091 = vand.u32 2147483647, %v1090
        %1092 = vmax.xlane.f32.xlu0 %v1091
        %v1093 = vpop.xlane.xlu0 %1092
        %v1094 = vmax.f32 %v1093, 1e-05
        %v1095 = vrcp.pop %v1094
        %v1096 = vmul.f32 127.0, %v1095
        %v1097 = vmul.f32 %v1090, %v1096
        %v1098 = vround.ne.pseudo %v1097
        %v1099 = vmul.f32 %v1094, 0.007874016
        %v1100 = vmul.f32 %v1098, %v1099
        %v1101 = vand.u32 2147483647, %v1100
        %1102 = vmax.xlane.f32.xlu0 %v1101
        %v1103 = vpop.xlane.xlu0 %1102
        %v1104 = vmax.f32 %v1103, 1e-05
        %v1105 = vrcp.pop %v1104
        %v1106 = vmul.f32 127.0, %v1105
        %v1107 = vmul.f32 %v1100, %v1106
        %v1108 = vround.ne.pseudo %v1107
        %v1109 = vmul.f32 %v1104, 0.007874016
        %v1110 = vpack.c.bf16 %v1108, %v1108
        %v1127 = vunpack.c.l.b16 %v545
        %v1128 = vunpack.c.l.b16 %v546
        %v1129 = vunpack.c.l.b16 %v547
        %v1130 = vunpack.c.l.b16 %v548
        %v1131 = vunpack.c.l.b16 %v549
        %v1132 = vunpack.c.l.b16 %v550
        %v1133 = vunpack.c.l.b16 %v551
        %v1134 = vunpack.c.l.b16 %v552
        %v1135 = vunpack.c.l.b16 %v553
        %v1136 = vunpack.c.l.b16 %v554
        %v1137 = vunpack.c.l.b16 %v555
        %v1138 = vunpack.c.l.b16 %v556
        %v1139 = vunpack.c.l.b16 %v557
        %v1140 = vunpack.c.l.b16 %v558
        %v1141 = vunpack.c.l.b16 %v559
        %v1142 = vunpack.c.l.b16 %v560
        %v1143 = vpack.c.b16 %v1128, %v1127
        %v1144 = vpack.c.b16 %v1130, %v1129
        %v1145 = vpack.c.b16 %v1132, %v1131
        %v1146 = vpack.c.b16 %v1134, %v1133
        %v1147 = vpack.c.b16 %v1136, %v1135
        %v1148 = vpack.c.b16 %v1138, %v1137
        %v1149 = vpack.c.b16 %v1140, %v1139
        %v1150 = vpack.c.b16 %v1142, %v1141
        %1159 = vmatprep.subr.bf16.mxu0 0
        %1160 = vmatpush1.bf16.msra.mxu0 %v1150
        %1161 = vmatprep.subr.bf16.mxu0 0
        %1162 = vmatpush1.bf16.msra.mxu0 %v1149
        %1163 = vmatprep.subr.bf16.mxu0 0
        %1164 = vmatpush1.bf16.msra.mxu0 %v1148
        %1165 = vmatprep.subr.bf16.mxu0 0
        %1166 = vmatpush1.bf16.msra.mxu0 %v1147
        %1167 = vmatprep.subr.bf16.mxu0 0
        %1168 = vmatpush1.bf16.msra.mxu0 %v1146
        %1169 = vmatprep.subr.bf16.mxu0 0
        %1170 = vmatpush1.bf16.msra.mxu0 %v1145
        %1171 = vmatprep.subr.bf16.mxu0 0
        %1172 = vmatpush1.bf16.msra.mxu0 %v1144
        %1173 = vmatprep.subr.bf16.mxu0 0
        %1174 = vmatpush1.bf16.msra.mxu0 %v1143
        %1175 = vmatprep.subr.bf16.mxu0 0
        %1176 = vmatpush2.bf16.msra.mxu0 0
        %1177 = vmatprep.subr.bf16.mxu0 0
        %1178 = vmatpush2.bf16.msra.mxu0 0
        %1179 = vmatprep.subr.bf16.mxu0 0
        %1180 = vmatpush2.bf16.msra.mxu0 0
        %1181 = vmatprep.subr.bf16.mxu0 0
        %1182 = vmatpush2.bf16.msra.mxu0 0
        %1183 = vmatprep.subr.bf16.mxu0 0
        %1184 = vmatpush2.bf16.msra.mxu0 0
        %1185 = vmatprep.subr.bf16.mxu0 0
        %1186 = vmatpush2.bf16.msra.mxu0 0
        %1187 = vmatprep.subr.bf16.mxu0 0
        %1188 = vmatpush2.bf16.msra.mxu0 0
        %1189 = vmatprep.subr.bf16.mxu0 0
        %1190 = vmatpush2.bf16.msra.mxu0 0
        %1191 = vmatprep.mubr.bf16.mxu0 0
        %1192 = vmatmul.mubr.bf16.gmra.mxu0 %v1110
        %v1193 = vpop.f32.mrf.mxu0
        %v1194 = vadd.f32 0.0, %v1193
        %v1195 = vpop.f32.mrf.mxu0
        %v1196 = vpop.f32.mrf.mxu0
        %v1197 = vpop.f32.mrf.mxu0
        %1198 = vdwg.mxu0
        %v1199 = vstv %s532
        %v1200 = vmul.f32 %v1109, %v1199
        %v1201 = vmul.f32 %v1194, %v1200
        %v1202 = vand.u32 2147483647, %v1201
        %v1203 = vsel %vm515, %v1202, -inf
        %1204 = vmax.xlane.f32.xlu0 %v1203
        %v1205 = vpop.xlane.xlu0 %1204
        %v1206 = vmax.f32 %v1205, 1e-05
        %v1207 = vrcp.pop %v1206
        %v1208 = vmul.f32 127.0, %v1207
        %v1209 = vmul.f32 %v1201, %v1208
        %v1210 = vround.ne.pseudo %v1209
        %v1211 = vmul.f32 %v1206, 0.007874016
        %v1212 = vmul.f32 %v1210, %v1211
        %v1213 = vadd.f32 %v999, %v1212
        %s1214 = sld [smem:[#allocation2 + $0x4]]
        %s1215 = sld [smem:[#allocation2 + $0x5]]
        %s1216 = sld [smem:[#allocation2 + $0x6]]
        %s1217 = sld [smem:[#allocation2 + $0x7]]
        %s1218 = scalar_lea.vmem %s7, 16
        %v1219 = vld [vmem:[%s1218] sm:$0xf]
        %v1220 = vld [vmem:[%s1218 + $0x4] sm:$0xf]
        %v1221 = vld [vmem:[%s1218 + $0x8] sm:$0xf]
        %v1222 = vld [vmem:[%s1218 + $0xc] sm:$0xf]
        %s1223 = scalar_lea.vmem %s8, 16
        %v1224 = vld [vmem:[%s1223] sm:$0xf]
        %v1225 = vld [vmem:[%s1223 + $0x4] sm:$0xf]
        %v1226 = vld [vmem:[%s1223 + $0x8] sm:$0xf]
        %v1227 = vld [vmem:[%s1223 + $0xc] sm:$0xf]
        %s1228 = scalar_lea.vmem %s9, 16
        %v1229 = vld [vmem:[%s1228] sm:$0xf]
        %v1230 = vld [vmem:[%s1228 + $0x4] sm:$0xf]
        %v1231 = vld [vmem:[%s1228 + $0x8] sm:$0xf]
        %v1232 = vld [vmem:[%s1228 + $0xc] sm:$0xf]
        %s1233 = scalar_lea.vmem %s10, 64
        %v1234 = vld [vmem:[%s1233] sm:$0xf]
        %v1235 = vld [vmem:[%s1233 + $0x4] sm:$0xf]
        %v1236 = vld [vmem:[%s1233 + $0x8] sm:$0xf]
        %v1237 = vld [vmem:[%s1233 + $0xc] sm:$0xf]
        %v1238 = vld [vmem:[%s1233 + $0x10] sm:$0xf]
        %v1239 = vld [vmem:[%s1233 + $0x14] sm:$0xf]
        %v1240 = vld [vmem:[%s1233 + $0x18] sm:$0xf]
        %v1241 = vld [vmem:[%s1233 + $0x1c] sm:$0xf]
        %v1242 = vld [vmem:[%s1233 + $0x20] sm:$0xf]
        %v1243 = vld [vmem:[%s1233 + $0x24] sm:$0xf]
        %v1244 = vld [vmem:[%s1233 + $0x28] sm:$0xf]
        %v1245 = vld [vmem:[%s1233 + $0x2c] sm:$0xf]
        %v1246 = vld [vmem:[%s1233 + $0x30] sm:$0xf]
        %v1247 = vld [vmem:[%s1233 + $0x34] sm:$0xf]
        %v1248 = vld [vmem:[%s1233 + $0x38] sm:$0xf]
        %v1249 = vld [vmem:[%s1233 + $0x3c] sm:$0xf]
        %s1250 = scalar_lea.vmem %s4, 1
        %v1251 = vld [vmem:[%s1250] sm:$0x1]
        %v1252 = vsel %vm515, %v1213, 0.0
        %1253 = vadd.xlane.f32.xlu0 %v1252
        %v1254 = vpop.xlane.xlu0 %1253
        %v1255 = vmul.f32 %v1254, %v565
        %v1256 = vsub.f32 %v1213, %v1255
        %v1257 = vmul.f32 %v1256, %v1256
        %v1258 = vsel %vm515, %v1257, 0.0
        %1259 = vadd.xlane.f32.xlu0 %v1258
        %v1260 = vpop.xlane.xlu0 %1259
        %v1261 = vmul.f32 %v1260, %v565
        %v1262 = vadd.f32 %v1261, 1e-05
        %v1263 = vrsqrt.pop %v1262
        %v1264 = vmul.f32 %v1256, %v1263
        %v1266 = vlaneseq
        %v1267 = vshrl.u32 %v1266, 7
        %v1268 = vsub.s32 0, %v1267
        %v1269 = vrot.slane %v1251, %v1268
        %v1271 = vmul.f32 %v1264, %v1269
        %v1272 = vand.u32 2147483647, %v1271
        %v1273 = vsel %vm515, %v1272, -inf
        %1274 = vmax.xlane.f32.xlu0 %v1273
        %v1275 = vpop.xlane.xlu0 %1274
        %v1276 = vmax.f32 %v1275, 1e-05
        %v1277 = vrcp.pop %v1276
        %v1278 = vmul.f32 127.0, %v1277
        %v1279 = vmul.f32 %v1271, %v1278
        %v1280 = vround.ne.pseudo %v1279
        %v1281 = vmul.f32 %v1276, 0.007874016
        %v1282 = vpack.c.bf16 %v1280, %v1280
        %v1287 = vunpack.c.l.b16 %v1219
        %v1288 = vunpack.c.l.b16 %v1220
        %v1289 = vunpack.c.l.b16 %v1221
        %v1290 = vunpack.c.l.b16 %v1222
        %v1291 = vpack.c.b16 %v1288, %v1287
        %v1292 = vpack.c.b16 %v1290, %v1289
        %v1296 = vsel %vm515, %v1282, 0
        %1298 = vmatprep.subr.bf16.mxu0 0
        %1299 = vmatpush1.bf16.msra.mxu0 0
        %1300 = vmatprep.subr.bf16.mxu0 0
        %1301 = vmatpush1.bf16.msra.mxu0 0
        %1302 = vmatprep.subr.bf16.mxu0 0
        %1303 = vmatpush1.bf16.msra.mxu0 0
        %1304 = vmatprep.subr.bf16.mxu0 0
        %1305 = vmatpush1.bf16.msra.mxu0 0
        %1306 = vmatprep.subr.bf16.mxu0 0
        %1307 = vmatpush1.bf16.msra.mxu0 0
        %1308 = vmatprep.subr.bf16.mxu0 0
        %1309 = vmatpush1.bf16.msra.mxu0 0
        %1310 = vmatprep.subr.bf16.mxu0 0
        %1311 = vmatpush1.bf16.msra.mxu0 %v1292
        %1312 = vmatprep.subr.bf16.mxu0 0
        %1313 = vmatpush1.bf16.msra.mxu0 %v1291
        %1314 = vmatprep.subr.bf16.mxu0 0
        %1315 = vmatpush2.bf16.msra.mxu0 0
        %1316 = vmatprep.subr.bf16.mxu0 0
        %1317 = vmatpush2.bf16.msra.mxu0 0
        %1318 = vmatprep.subr.bf16.mxu0 0
        %1319 = vmatpush2.bf16.msra.mxu0 0
        %1320 = vmatprep.subr.bf16.mxu0 0
        %1321 = vmatpush2.bf16.msra.mxu0 0
        %1322 = vmatprep.subr.bf16.mxu0 0
        %1323 = vmatpush2.bf16.msra.mxu0 0
        %1324 = vmatprep.subr.bf16.mxu0 0
        %1325 = vmatpush2.bf16.msra.mxu0 0
        %1326 = vmatprep.subr.bf16.mxu0 0
        %1327 = vmatpush2.bf16.msra.mxu0 0
        %1328 = vmatprep.subr.bf16.mxu0 0
        %1329 = vmatpush2.bf16.msra.mxu0 0
        %1330 = vmatprep.mubr.bf16.mxu0 0
        %1331 = vmatmul.mubr.bf16.gmra.mxu0 %v1296
        %v1332 = vpop.f32.mrf.mxu0
        %v1333 = vadd.f32 0.0, %v1332
        %v1334 = vpop.f32.mrf.mxu0
        %v1335 = vpop.f32.mrf.mxu0
        %v1336 = vpop.f32.mrf.mxu0
        %1337 = vdwg.mxu0
        %v1338 = vstv %s1214
        %v1339 = vmul.f32 %v1281, %v1338
        %v1340 = vmul.f32 %v1333, %v1339
        %v1341 = vpack.c.bf16 %v1340, %v1340
        %1343 = vrot.lane.b32.xlu0 %v1341, 96
        %v1344 = vpop.permute.xlu0 %1343
        %v1346 = vsel %vm656, %v1341, 0
        %v1349 = vsel %vm656, %v1344, 0
        %1351 = vmatprep.subr.bf16.mxu0 0
        %1352 = vmatpush1.bf16.xpose.msra.mxu0 0
        %1353 = vmatprep.subr.bf16.mxu0 0
        %1354 = vmatpush1.bf16.xpose.msra.mxu0 0
        %1355 = vmatprep.subr.bf16.mxu0 0
        %1356 = vmatpush1.bf16.xpose.msra.mxu0 0
        %1357 = vmatprep.subr.bf16.mxu0 0
        %1358 = vmatpush1.bf16.xpose.msra.mxu0 0
        %1359 = vmatprep.subr.bf16.mxu0 0
        %1360 = vmatpush1.bf16.xpose.msra.mxu0 0
        %1361 = vmatprep.subr.bf16.mxu0 0
        %1362 = vmatpush1.bf16.xpose.msra.mxu0 0
        %1363 = vmatprep.subr.bf16.mxu0 0
        %1364 = vmatpush1.bf16.xpose.msra.mxu0 0
        %1365 = vmatprep.subr.bf16.mxu0 0
        %1366 = vmatpush1.bf16.xpose.msra.mxu0 %v1349
        %1367 = vmatprep.subr.bf16.mxu0 0
        %1368 = vmatpush2.bf16.xpose.msra.mxu0 0
        %1369 = vmatprep.subr.bf16.mxu0 0
        %1370 = vmatpush2.bf16.xpose.msra.mxu0 0
        %1371 = vmatprep.subr.bf16.mxu0 0
        %1372 = vmatpush2.bf16.xpose.msra.mxu0 0
        %1373 = vmatprep.subr.bf16.mxu0 0
        %1374 = vmatpush2.bf16.xpose.msra.mxu0 0
        %1375 = vmatprep.subr.bf16.mxu0 0
        %1376 = vmatpush2.bf16.xpose.msra.mxu0 0
        %1377 = vmatprep.subr.bf16.mxu0 0
        %1378 = vmatpush2.bf16.xpose.msra.mxu0 0
        %1379 = vmatprep.subr.bf16.mxu0 0
        %1380 = vmatpush2.bf16.xpose.msra.mxu0 0
        %1381 = vmatprep.subr.bf16.mxu0 0
        %1382 = vmatpush2.bf16.xpose.msra.mxu0 0
        %1383 = vmatprep.mubr.bf16.mxu0 0
        %1384 = vmatmul.mubr.bf16.gmra.mxu0 %v1346
        %v1385 = vpop.f32.mrf.mxu0
        %v1386 = vadd.f32 0.0, %v1385
        %v1387 = vpop.f32.mrf.mxu0
        %v1388 = vpop.f32.mrf.mxu0
        %v1389 = vpop.f32.mrf.mxu0
        %1390 = vdwg.mxu0
        %v1391 = vmul.f32 %v1386, 0.25
        %v1392 = vsel %vm528, %v1391, -inf
        %v1393 = vsel %vm705, %v1392, -inf
        %1394 = vmax.xlane.f32.xlu0 %v1393
        %v1395 = vpop.xlane.xlu0 %1394
        %v1396 = vsub.f32 %v1392, %v1395
        %v1397 = vmul.f32 %v1396, 1.442695
        %v1398 = vpow.pop %v1397
        %v1399 = vsel %vm705, %v1398, 0.0
        %1400 = vadd.xlane.f32.xlu0 %v1399
        %v1401 = vpop.xlane.xlu0 %1400
        %v1402 = vrcp.pop %v1401
        %v1403 = vmul.f32 %v1398, %v1402
        %v1404 = vpack.c.bf16 %v1403, %v1403
        %1405 = vrot.lane.b32.xlu0 %v1341, 64
        %v1406 = vpop.permute.xlu0 %1405
        %v1408 = vsel %vm705, %v1404, 0
        %v1411 = vsel %vm723, %v1406, 0
        %1413 = vmatprep.subr.bf16.mxu0 0
        %1414 = vmatpush1.bf16.msra.mxu0 0
        %1415 = vmatprep.subr.bf16.mxu0 0
        %1416 = vmatpush1.bf16.msra.mxu0 0
        %1417 = vmatprep.subr.bf16.mxu0 0
        %1418 = vmatpush1.bf16.msra.mxu0 0
        %1419 = vmatprep.subr.bf16.mxu0 0
        %1420 = vmatpush1.bf16.msra.mxu0 0
        %1421 = vmatprep.subr.bf16.mxu0 0
        %1422 = vmatpush1.bf16.msra.mxu0 0
        %1423 = vmatprep.subr.bf16.mxu0 0
        %1424 = vmatpush1.bf16.msra.mxu0 0
        %1425 = vmatprep.subr.bf16.mxu0 0
        %1426 = vmatpush1.bf16.msra.mxu0 0
        %1427 = vmatprep.subr.bf16.mxu0 0
        %1428 = vmatpush1.bf16.msra.mxu0 %v1411
        %1429 = vmatprep.subr.bf16.mxu0 0
        %1430 = vmatpush2.bf16.msra.mxu0 0
        %1431 = vmatprep.subr.bf16.mxu0 0
        %1432 = vmatpush2.bf16.msra.mxu0 0
        %1433 = vmatprep.subr.bf16.mxu0 0
        %1434 = vmatpush2.bf16.msra.mxu0 0
        %1435 = vmatprep.subr.bf16.mxu0 0
        %1436 = vmatpush2.bf16.msra.mxu0 0
        %1437 = vmatprep.subr.bf16.mxu0 0
        %1438 = vmatpush2.bf16.msra.mxu0 0
        %1439 = vmatprep.subr.bf16.mxu0 0
        %1440 = vmatpush2.bf16.msra.mxu0 0
        %1441 = vmatprep.subr.bf16.mxu0 0
        %1442 = vmatpush2.bf16.msra.mxu0 0
        %1443 = vmatprep.subr.bf16.mxu0 0
        %1444 = vmatpush2.bf16.msra.mxu0 0
        %1445 = vmatprep.mubr.bf16.mxu0 0
        %1446 = vmatmul.mubr.bf16.gmra.mxu0 %v1408
        %v1447 = vpop.f32.mrf.mxu0
        %v1448 = vadd.f32 0.0, %v1447
        %v1449 = vpop.f32.mrf.mxu0
        %v1450 = vpop.f32.mrf.mxu0
        %v1451 = vpop.f32.mrf.mxu0
        %1452 = vdwg.mxu0
        %1453 = vrot.lane.b32.xlu0 %v1341, 112
        %v1454 = vpop.permute.xlu0 %1453
        %1455 = vrot.lane.b32.xlu0 %v1341, 80
        %v1456 = vpop.permute.xlu0 %1455
        %v1458 = vsel %vm656, %v1454, 0
        %v1461 = vsel %vm656, %v1456, 0
        %1463 = vmatprep.subr.bf16.mxu0 0
        %1464 = vmatpush1.bf16.xpose.msra.mxu0 0
        %1465 = vmatprep.subr.bf16.mxu0 0
        %1466 = vmatpush1.bf16.xpose.msra.mxu0 0
        %1467 = vmatprep.subr.bf16.mxu0 0
        %1468 = vmatpush1.bf16.xpose.msra.mxu0 0
        %1469 = vmatprep.subr.bf16.mxu0 0
        %1470 = vmatpush1.bf16.xpose.msra.mxu0 0
        %1471 = vmatprep.subr.bf16.mxu0 0
        %1472 = vmatpush1.bf16.xpose.msra.mxu0 0
        %1473 = vmatprep.subr.bf16.mxu0 0
        %1474 = vmatpush1.bf16.xpose.msra.mxu0 0
        %1475 = vmatprep.subr.bf16.mxu0 0
        %1476 = vmatpush1.bf16.xpose.msra.mxu0 0
        %1477 = vmatprep.subr.bf16.mxu0 0
        %1478 = vmatpush1.bf16.xpose.msra.mxu0 %v1461
        %1479 = vmatprep.subr.bf16.mxu0 0
        %1480 = vmatpush2.bf16.xpose.msra.mxu0 0
        %1481 = vmatprep.subr.bf16.mxu0 0
        %1482 = vmatpush2.bf16.xpose.msra.mxu0 0
        %1483 = vmatprep.subr.bf16.mxu0 0
        %1484 = vmatpush2.bf16.xpose.msra.mxu0 0
        %1485 = vmatprep.subr.bf16.mxu0 0
        %1486 = vmatpush2.bf16.xpose.msra.mxu0 0
        %1487 = vmatprep.subr.bf16.mxu0 0
        %1488 = vmatpush2.bf16.xpose.msra.mxu0 0
        %1489 = vmatprep.subr.bf16.mxu0 0
        %1490 = vmatpush2.bf16.xpose.msra.mxu0 0
        %1491 = vmatprep.subr.bf16.mxu0 0
        %1492 = vmatpush2.bf16.xpose.msra.mxu0 0
        %1493 = vmatprep.subr.bf16.mxu0 0
        %1494 = vmatpush2.bf16.xpose.msra.mxu0 0
        %1495 = vmatprep.mubr.bf16.mxu0 0
        %1496 = vmatmul.mubr.bf16.gmra.mxu0 %v1458
        %v1497 = vpop.f32.mrf.mxu0
        %v1498 = vadd.f32 0.0, %v1497
        %v1499 = vpop.f32.mrf.mxu0
        %v1500 = vpop.f32.mrf.mxu0
        %v1501 = vpop.f32.mrf.mxu0
        %1502 = vdwg.mxu0
        %v1503 = vmul.f32 %v1498, 0.25
        %v1504 = vsel %vm528, %v1503, -inf
        %v1505 = vsel %vm705, %v1504, -inf
        %1506 = vmax.xlane.f32.xlu0 %v1505
        %v1507 = vpop.xlane.xlu0 %1506
        %v1508 = vsub.f32 %v1504, %v1507
        %v1509 = vmul.f32 %v1508, 1.442695
        %v1510 = vpow.pop %v1509
        %v1511 = vsel %vm705, %v1510, 0.0
        %1512 = vadd.xlane.f32.xlu0 %v1511
        %v1513 = vpop.xlane.xlu0 %1512
        %v1514 = vrcp.pop %v1513
        %v1515 = vmul.f32 %v1510, %v1514
        %v1516 = vpack.c.bf16 %v1515, %v1515
        %1517 = vrot.lane.b32.xlu0 %v1341, 48
        %v1518 = vpop.permute.xlu0 %1517
        %v1520 = vsel %vm705, %v1516, 0
        %v1523 = vsel %vm723, %v1518, 0
        %1525 = vmatprep.subr.bf16.mxu0 0
        %1526 = vmatpush1.bf16.msra.mxu0 0
        %1527 = vmatprep.subr.bf16.mxu0 0
        %1528 = vmatpush1.bf16.msra.mxu0 0
        %1529 = vmatprep.subr.bf16.mxu0 0
        %1530 = vmatpush1.bf16.msra.mxu0 0
        %1531 = vmatprep.subr.bf16.mxu0 0
        %1532 = vmatpush1.bf16.msra.mxu0 0
        %1533 = vmatprep.subr.bf16.mxu0 0
        %1534 = vmatpush1.bf16.msra.mxu0 0
        %1535 = vmatprep.subr.bf16.mxu0 0
        %1536 = vmatpush1.bf16.msra.mxu0 0
        %1537 = vmatprep.subr.bf16.mxu0 0
        %1538 = vmatpush1.bf16.msra.mxu0 0
        %1539 = vmatprep.subr.bf16.mxu0 0
        %1540 = vmatpush1.bf16.msra.mxu0 %v1523
        %1541 = vmatprep.subr.bf16.mxu0 0
        %1542 = vmatpush2.bf16.msra.mxu0 0
        %1543 = vmatprep.subr.bf16.mxu0 0
        %1544 = vmatpush2.bf16.msra.mxu0 0
        %1545 = vmatprep.subr.bf16.mxu0 0
        %1546 = vmatpush2.bf16.msra.mxu0 0
        %1547 = vmatprep.subr.bf16.mxu0 0
        %1548 = vmatpush2.bf16.msra.mxu0 0
        %1549 = vmatprep.subr.bf16.mxu0 0
        %1550 = vmatpush2.bf16.msra.mxu0 0
        %1551 = vmatprep.subr.bf16.mxu0 0
        %1552 = vmatpush2.bf16.msra.mxu0 0
        %1553 = vmatprep.subr.bf16.mxu0 0
        %1554 = vmatpush2.bf16.msra.mxu0 0
        %1555 = vmatprep.subr.bf16.mxu0 0
        %1556 = vmatpush2.bf16.msra.mxu0 0
        %1557 = vmatprep.mubr.bf16.mxu0 0
        %1558 = vmatmul.mubr.bf16.gmra.mxu0 %v1520
        %v1559 = vpop.f32.mrf.mxu0
        %v1560 = vadd.f32 0.0, %v1559
        %v1561 = vpop.f32.mrf.mxu0
        %v1562 = vpop.f32.mrf.mxu0
        %v1563 = vpop.f32.mrf.mxu0
        %1564 = vdwg.mxu0
        %v1565 = vand.u32 2147483647, %v1448
        %v1566 = vsel %vm656, %v1565, -inf
        %1567 = vmax.xlane.f32.xlu0 %v1566
        %v1568 = vpop.xlane.xlu0 %1567
        %v1569 = vmax.f32 %v1568, 1e-05
        %v1570 = vand.u32 2147483647, %v1560
        %v1571 = vsel %vm656, %v1570, -inf
        %1572 = vmax.xlane.f32.xlu0 %v1571
        %v1573 = vpop.xlane.xlu0 %1572
        %v1574 = vmax.f32 %v1569, %v1573
        %v1575 = vrcp.pop %v1574
        %v1576 = vmul.f32 127.0, %v1575
        %v1577 = vmul.f32 %v1448, %v1576
        %v1578 = vround.ne.pseudo %v1577
        %v1579 = vpack.c.bf16 %v1578, %v1578
        %v1580 = vmul.f32 %v1560, %v1576
        %v1581 = vround.ne.pseudo %v1580
        %v1582 = vpack.c.bf16 %v1581, %v1581
        %v1585 = vunpack.c.l.b16 %v1226
        %v1586 = vunpack.c.l.b16 %v1227
        %v1587 = vpack.c.b16 %v1586, %v1585
        %v1590 = vsel %vm656, %v1582, 0
        %1592 = vmatprep.subr.bf16.mxu0 0
        %1593 = vmatpush1.bf16.msra.mxu0 0
        %1594 = vmatprep.subr.bf16.mxu0 0
        %1595 = vmatpush1.bf16.msra.mxu0 0
        %1596 = vmatprep.subr.bf16.mxu0 0
        %1597 = vmatpush1.bf16.msra.mxu0 0
        %1598 = vmatprep.subr.bf16.mxu0 0
        %1599 = vmatpush1.bf16.msra.mxu0 0
        %1600 = vmatprep.subr.bf16.mxu0 0
        %1601 = vmatpush1.bf16.msra.mxu0 0
        %1602 = vmatprep.subr.bf16.mxu0 0
        %1603 = vmatpush1.bf16.msra.mxu0 0
        %1604 = vmatprep.subr.bf16.mxu0 0
        %1605 = vmatpush1.bf16.msra.mxu0 0
        %1606 = vmatprep.subr.bf16.mxu0 0
        %1607 = vmatpush1.bf16.msra.mxu0 %v1587
        %1608 = vmatprep.subr.bf16.mxu0 0
        %1609 = vmatpush2.bf16.msra.mxu0 0
        %1610 = vmatprep.subr.bf16.mxu0 0
        %1611 = vmatpush2.bf16.msra.mxu0 0
        %1612 = vmatprep.subr.bf16.mxu0 0
        %1613 = vmatpush2.bf16.msra.mxu0 0
        %1614 = vmatprep.subr.bf16.mxu0 0
        %1615 = vmatpush2.bf16.msra.mxu0 0
        %1616 = vmatprep.subr.bf16.mxu0 0
        %1617 = vmatpush2.bf16.msra.mxu0 0
        %1618 = vmatprep.subr.bf16.mxu0 0
        %1619 = vmatpush2.bf16.msra.mxu0 0
        %1620 = vmatprep.subr.bf16.mxu0 0
        %1621 = vmatpush2.bf16.msra.mxu0 0
        %1622 = vmatprep.subr.bf16.mxu0 0
        %1623 = vmatpush2.bf16.msra.mxu0 0
        %1624 = vmatprep.mubr.bf16.mxu0 0
        %1625 = vmatmul.mubr.bf16.gmra.mxu0 %v1590
        %v1626 = vpop.f32.mrf.mxu0
        %v1627 = vadd.f32 0.0, %v1626
        %v1628 = vpop.f32.mrf.mxu0
        %v1629 = vpop.f32.mrf.mxu0
        %v1630 = vpop.f32.mrf.mxu0
        %1631 = vdwg.mxu0
        %v1634 = vunpack.c.l.b16 %v1224
        %v1635 = vunpack.c.l.b16 %v1225
        %v1636 = vpack.c.b16 %v1635, %v1634
        %v1639 = vsel %vm656, %v1579, 0
        %1641 = vmatprep.subr.bf16.mxu0 0
        %1642 = vmatpush1.bf16.msra.mxu0 0
        %1643 = vmatprep.subr.bf16.mxu0 0
        %1644 = vmatpush1.bf16.msra.mxu0 0
        %1645 = vmatprep.subr.bf16.mxu0 0
        %1646 = vmatpush1.bf16.msra.mxu0 0
        %1647 = vmatprep.subr.bf16.mxu0 0
        %1648 = vmatpush1.bf16.msra.mxu0 0
        %1649 = vmatprep.subr.bf16.mxu0 0
        %1650 = vmatpush1.bf16.msra.mxu0 0
        %1651 = vmatprep.subr.bf16.mxu0 0
        %1652 = vmatpush1.bf16.msra.mxu0 0
        %1653 = vmatprep.subr.bf16.mxu0 0
        %1654 = vmatpush1.bf16.msra.mxu0 0
        %1655 = vmatprep.subr.bf16.mxu0 0
        %1656 = vmatpush1.bf16.msra.mxu0 %v1636
        %1657 = vmatprep.subr.bf16.mxu0 0
        %1658 = vmatpush2.bf16.msra.mxu0 0
        %1659 = vmatprep.subr.bf16.mxu0 0
        %1660 = vmatpush2.bf16.msra.mxu0 0
        %1661 = vmatprep.subr.bf16.mxu0 0
        %1662 = vmatpush2.bf16.msra.mxu0 0
        %1663 = vmatprep.subr.bf16.mxu0 0
        %1664 = vmatpush2.bf16.msra.mxu0 0
        %1665 = vmatprep.subr.bf16.mxu0 0
        %1666 = vmatpush2.bf16.msra.mxu0 0
        %1667 = vmatprep.subr.bf16.mxu0 0
        %1668 = vmatpush2.bf16.msra.mxu0 0
        %1669 = vmatprep.subr.bf16.mxu0 0
        %1670 = vmatpush2.bf16.msra.mxu0 0
        %1671 = vmatprep.subr.bf16.mxu0 0
        %1672 = vmatpush2.bf16.msra.mxu0 0
        %1673 = vmatprep.mubr.bf16.mxu0 0
        %1674 = vmatmul.mubr.bf16.gmra.mxu0 %v1639
        %v1675 = vpop.f32.mrf.mxu0
        %v1676 = vadd.f32 %v1627, %v1675
        %v1677 = vpop.f32.mrf.mxu0
        %v1678 = vpop.f32.mrf.mxu0
        %v1679 = vpop.f32.mrf.mxu0
        %1680 = vdwg.mxu0
        %v1681 = vmul.f32 %v1574, 0.007874016
        %v1682 = vstv %s1215
        %v1683 = vmul.f32 %v1681, %v1682
        %v1684 = vmul.f32 %v1676, %v1683
        %v1685 = vadd.f32 %v1213, %v1684
        %s1686 = scalar_lea.vmem %s5, 1
        %v1687 = vld [vmem:[%s1686] sm:$0x1]
        %v1688 = vsel %vm515, %v1685, 0.0
        %1689 = vadd.xlane.f32.xlu0 %v1688
        %v1690 = vpop.xlane.xlu0 %1689
        %v1691 = vmul.f32 %v1690, %v565
        %v1692 = vsub.f32 %v1685, %v1691
        %v1693 = vmul.f32 %v1692, %v1692
        %v1694 = vsel %vm515, %v1693, 0.0
        %1695 = vadd.xlane.f32.xlu0 %v1694
        %v1696 = vpop.xlane.xlu0 %1695
        %v1697 = vmul.f32 %v1696, %v565
        %v1698 = vadd.f32 %v1697, 1e-05
        %v1699 = vrsqrt.pop %v1698
        %v1700 = vmul.f32 %v1692, %v1699
        %v1702 = vlaneseq
        %v1703 = vshrl.u32 %v1702, 7
        %v1704 = vsub.s32 0, %v1703
        %v1705 = vrot.slane %v1687, %v1704
        %v1707 = vmul.f32 %v1700, %v1705
        %v1708 = vand.u32 2147483647, %v1707
        %v1709 = vsel %vm515, %v1708, -inf
        %1710 = vmax.xlane.f32.xlu0 %v1709
        %v1711 = vpop.xlane.xlu0 %1710
        %v1712 = vmax.f32 %v1711, 1e-05
        %v1713 = vrcp.pop %v1712
        %v1714 = vmul.f32 127.0, %v1713
        %v1715 = vmul.f32 %v1707, %v1714
        %v1716 = vround.ne.pseudo %v1715
        %v1717 = vmul.f32 %v1712, 0.007874016
        %v1718 = vpack.c.bf16 %v1716, %v1716
        %v1723 = vunpack.c.l.b16 %v1229
        %v1724 = vunpack.c.l.b16 %v1230
        %v1725 = vunpack.c.l.b16 %v1231
        %v1726 = vunpack.c.l.b16 %v1232
        %v1727 = vpack.c.b16 %v1724, %v1723
        %v1728 = vpack.c.b16 %v1726, %v1725
        %v1732 = vsel %vm515, %v1718, 0
        %1734 = vmatprep.subr.bf16.mxu0 0
        %1735 = vmatpush1.bf16.msra.mxu0 0
        %1736 = vmatprep.subr.bf16.mxu0 0
        %1737 = vmatpush1.bf16.msra.mxu0 0
        %1738 = vmatprep.subr.bf16.mxu0 0
        %1739 = vmatpush1.bf16.msra.mxu0 0
        %1740 = vmatprep.subr.bf16.mxu0 0
        %1741 = vmatpush1.bf16.msra.mxu0 0
        %1742 = vmatprep.subr.bf16.mxu0 0
        %1743 = vmatpush1.bf16.msra.mxu0 0
        %1744 = vmatprep.subr.bf16.mxu0 0
        %1745 = vmatpush1.bf16.msra.mxu0 0
        %1746 = vmatprep.subr.bf16.mxu0 0
        %1747 = vmatpush1.bf16.msra.mxu0 %v1728
        %1748 = vmatprep.subr.bf16.mxu0 0
        %1749 = vmatpush1.bf16.msra.mxu0 %v1727
        %1750 = vmatprep.subr.bf16.mxu0 0
        %1751 = vmatpush2.bf16.msra.mxu0 0
        %1752 = vmatprep.subr.bf16.mxu0 0
        %1753 = vmatpush2.bf16.msra.mxu0 0
        %1754 = vmatprep.subr.bf16.mxu0 0
        %1755 = vmatpush2.bf16.msra.mxu0 0
        %1756 = vmatprep.subr.bf16.mxu0 0
        %1757 = vmatpush2.bf16.msra.mxu0 0
        %1758 = vmatprep.subr.bf16.mxu0 0
        %1759 = vmatpush2.bf16.msra.mxu0 0
        %1760 = vmatprep.subr.bf16.mxu0 0
        %1761 = vmatpush2.bf16.msra.mxu0 0
        %1762 = vmatprep.subr.bf16.mxu0 0
        %1763 = vmatpush2.bf16.msra.mxu0 0
        %1764 = vmatprep.subr.bf16.mxu0 0
        %1765 = vmatpush2.bf16.msra.mxu0 0
        %1766 = vmatprep.mubr.bf16.mxu0 0
        %1767 = vmatmul.mubr.bf16.gmra.mxu0 %v1732
        %v1768 = vpop.f32.mrf.mxu0
        %v1769 = vadd.f32 0.0, %v1768
        %v1770 = vpop.f32.mrf.mxu0
        %v1771 = vpop.f32.mrf.mxu0
        %v1772 = vpop.f32.mrf.mxu0
        %1773 = vdwg.mxu0
        %v1774 = vstv %s1216
        %v1775 = vmul.f32 %v1717, %v1774
        %v1776 = vmul.f32 %v1769, %v1775
        %v1777 = vmax.f32 %v1776, 0.0
        %v1778 = vand.u32 2147483647, %v1777
        %1779 = vmax.xlane.f32.xlu0 %v1778
        %v1780 = vpop.xlane.xlu0 %1779
        %v1781 = vmax.f32 %v1780, 1e-05
        %v1782 = vrcp.pop %v1781
        %v1783 = vmul.f32 127.0, %v1782
        %v1784 = vmul.f32 %v1777, %v1783
        %v1785 = vround.ne.pseudo %v1784
        %v1786 = vmul.f32 %v1781, 0.007874016
        %v1787 = vmul.f32 %v1785, %v1786
        %v1788 = vand.u32 2147483647, %v1787
        %1789 = vmax.xlane.f32.xlu0 %v1788
        %v1790 = vpop.xlane.xlu0 %1789
        %v1791 = vmax.f32 %v1790, 1e-05
        %v1792 = vrcp.pop %v1791
        %v1793 = vmul.f32 127.0, %v1792
        %v1794 = vmul.f32 %v1787, %v1793
        %v1795 = vround.ne.pseudo %v1794
        %v1796 = vmul.f32 %v1791, 0.007874016
        %v1797 = vpack.c.bf16 %v1795, %v1795
        %v1814 = vunpack.c.l.b16 %v1234
        %v1815 = vunpack.c.l.b16 %v1235
        %v1816 = vunpack.c.l.b16 %v1236
        %v1817 = vunpack.c.l.b16 %v1237
        %v1818 = vunpack.c.l.b16 %v1238
        %v1819 = vunpack.c.l.b16 %v1239
        %v1820 = vunpack.c.l.b16 %v1240
        %v1821 = vunpack.c.l.b16 %v1241
        %v1822 = vunpack.c.l.b16 %v1242
        %v1823 = vunpack.c.l.b16 %v1243
        %v1824 = vunpack.c.l.b16 %v1244
        %v1825 = vunpack.c.l.b16 %v1245
        %v1826 = vunpack.c.l.b16 %v1246
        %v1827 = vunpack.c.l.b16 %v1247
        %v1828 = vunpack.c.l.b16 %v1248
        %v1829 = vunpack.c.l.b16 %v1249
        %v1830 = vpack.c.b16 %v1815, %v1814
        %v1831 = vpack.c.b16 %v1817, %v1816
        %v1832 = vpack.c.b16 %v1819, %v1818
        %v1833 = vpack.c.b16 %v1821, %v1820
        %v1834 = vpack.c.b16 %v1823, %v1822
        %v1835 = vpack.c.b16 %v1825, %v1824
        %v1836 = vpack.c.b16 %v1827, %v1826
        %v1837 = vpack.c.b16 %v1829, %v1828
        %1846 = vmatprep.subr.bf16.mxu0 0
        %1847 = vmatpush1.bf16.msra.mxu0 %v1837
        %1848 = vmatprep.subr.bf16.mxu0 0
        %1849 = vmatpush1.bf16.msra.mxu0 %v1836
        %1850 = vmatprep.subr.bf16.mxu0 0
        %1851 = vmatpush1.bf16.msra.mxu0 %v1835
        %1852 = vmatprep.subr.bf16.mxu0 0
        %1853 = vmatpush1.bf16.msra.mxu0 %v1834
        %1854 = vmatprep.subr.bf16.mxu0 0
        %1855 = vmatpush1.bf16.msra.mxu0 %v1833
        %1856 = vmatprep.subr.bf16.mxu0 0
        %1857 = vmatpush1.bf16.msra.mxu0 %v1832
        %1858 = vmatprep.subr.bf16.mxu0 0
        %1859 = vmatpush1.bf16.msra.mxu0 %v1831
        %1860 = vmatprep.subr.bf16.mxu0 0
        %1861 = vmatpush1.bf16.msra.mxu0 %v1830
        %1862 = vmatprep.subr.bf16.mxu0 0
        %1863 = vmatpush2.bf16.msra.mxu0 0
        %1864 = vmatprep.subr.bf16.mxu0 0
        %1865 = vmatpush2.bf16.msra.mxu0 0
        %1866 = vmatprep.subr.bf16.mxu0 0
        %1867 = vmatpush2.bf16.msra.mxu0 0
        %1868 = vmatprep.subr.bf16.mxu0 0
        %1869 = vmatpush2.bf16.msra.mxu0 0
        %1870 = vmatprep.subr.bf16.mxu0 0
        %1871 = vmatpush2.bf16.msra.mxu0 0
        %1872 = vmatprep.subr.bf16.mxu0 0
        %1873 = vmatpush2.bf16.msra.mxu0 0
        %1874 = vmatprep.subr.bf16.mxu0 0
        %1875 = vmatpush2.bf16.msra.mxu0 0
        %1876 = vmatprep.subr.bf16.mxu0 0
        %1877 = vmatpush2.bf16.msra.mxu0 0
        %1878 = vmatprep.mubr.bf16.mxu0 0
        %1879 = vmatmul.mubr.bf16.gmra.mxu0 %v1797
        %v1880 = vpop.f32.mrf.mxu0
        %v1881 = vadd.f32 0.0, %v1880
        %v1882 = vpop.f32.mrf.mxu0
        %v1883 = vpop.f32.mrf.mxu0
        %v1884 = vpop.f32.mrf.mxu0
        %1885 = vdwg.mxu0
        %v1886 = vstv %s1217
        %v1887 = vmul.f32 %v1796, %v1886
        %v1888 = vmul.f32 %v1881, %v1887
        %v1889 = vand.u32 2147483647, %v1888
        %v1890 = vsel %vm515, %v1889, -inf
        %1891 = vmax.xlane.f32.xlu0 %v1890
        %v1892 = vpop.xlane.xlu0 %1891
        %v1893 = vmax.f32 %v1892, 1e-05
        %v1894 = vrcp.pop %v1893
        %v1895 = vmul.f32 127.0, %v1894
        %v1896 = vmul.f32 %v1888, %v1895
        %v1897 = vround.ne.pseudo %v1896
        %v1898 = vmul.f32 %v1893, 0.007874016
        %v1899 = vmul.f32 %v1897, %v1898
        %v1900 = vadd.f32 %v1685, %v1899
        %v1901 = vld [vmem:[%s6] sm:$0x1]
        %vm1902 = vcmask 261127
        %v1903 = vsel %vm1902, %v1900, 0.0
        %1904 = vadd.xlane.f32.xlu0 %v1903
        %v1905 = vpop.xlane.xlu0 %1904
        %v1906 = vmul.f32 %v1905, %v565
        %v1907 = vsub.f32 %v1900, %v1906
        %v1908 = vmul.f32 %v1907, %v1907
        %v1909 = vsel %vm1902, %v1908, 0.0
        %1910 = vadd.xlane.f32.xlu0 %v1909
        %v1911 = vpop.xlane.xlu0 %1910
        %v1912 = vmul.f32 %v1911, %v565
        %v1913 = vadd.f32 %v1912, 1e-05
        %v1914 = vrsqrt.pop %v1913
        %v1915 = vmul.f32 %v1907, %v1914
        %v1917 = vlaneseq
        %v1918 = vshrl.u32 %v1917, 7
        %v1919 = vsub.s32 0, %v1918
        %v1920 = vrot.slane %v1901, %v1919
        %v1922 = vmul.f32 %v1915, %v1920
        %v1923 = vand.u32 2147483647, %v1922
        %v1924 = vsel %vm1902, %v1923, -inf
        %1925 = vmax.xlane.f32.xlu0 %v1924
        %v1926 = vpop.xlane.xlu0 %1925
        %v1927 = vmax.f32 %v1926, 1e-05
        %v1928 = vrcp.pop %v1927
        %v1929 = vmul.f32 127.0, %v1928
        %v1930 = vmul.f32 %v1922, %v1929
        %v1931 = vround.ne.pseudo %v1930
        %v1932 = vmul.f32 %v1927, 0.007874016
        %v1933 = vmul.f32 %v1931, %v1932
        %v1934 = vld [vmem:[%s11] sm:$0xff]
        %v1935 = vld [vmem:[%s11 + $0x8] sm:$0xff]
        %v1936 = vld [vmem:[%s11 + $0x10] sm:$0xff]
        %v1937 = vld [vmem:[%s11 + $0x18] sm:$0xff]
        %v1939 = vrot.slane %v1933, 7
        %v1940 = vsel %vm515, %v1939, 0
        %1942 = vmatprep.subr.mxu0 0.0
        %1943 = vmatpush1.msra.mxu0 0.0
        %1944 = vmatprep.subr.mxu0 0.0
        %1945 = vmatpush1.msra.mxu0 0.0
        %1946 = vmatprep.subr.mxu0 0.0
        %1947 = vmatpush1.msra.mxu0 0.0
        %1948 = vmatprep.subr.mxu0 0.0
        %1949 = vmatpush1.msra.mxu0 0.0
        %1950 = vmatprep.subr.mxu0 0.0
        %1951 = vmatpush1.msra.mxu0 0.0
        %1952 = vmatprep.subr.mxu0 0.0
        %1953 = vmatpush1.msra.mxu0 0.0
        %1954 = vmatprep.subr.mxu0 0.0
        %1955 = vmatpush1.msra.mxu0 0.0
        %1956 = vmatprep.subr.mxu0 0.0
        %1957 = vmatpush1.msra.mxu0 0.0
        %1958 = vmatprep.subr.mxu0 0.0
        %1959 = vmatpush1.msra.mxu0 0.0
        %1960 = vmatprep.subr.mxu0 0.0
        %1961 = vmatpush1.msra.mxu0 0.0
        %1962 = vmatprep.subr.mxu0 0.0
        %1963 = vmatpush1.msra.mxu0 0.0
        %1964 = vmatprep.subr.mxu0 0.0
        %1965 = vmatpush1.msra.mxu0 0.0
        %1966 = vmatprep.subr.mxu0 0.0
        %1967 = vmatpush1.msra.mxu0 %v1937
        %1968 = vmatprep.subr.mxu0 0.0
        %1969 = vmatpush1.msra.mxu0 %v1936
        %1970 = vmatprep.subr.mxu0 0.0
        %1971 = vmatpush1.msra.mxu0 %v1935
        %1972 = vmatprep.subr.mxu0 0.0
        %1973 = vmatpush1.msra.mxu0 %v1934
        %1974 = vmatprep.subr.mxu0 0.0
        %1975 = vmatpush2.msra.mxu0 0.0
        %1976 = vmatprep.subr.mxu0 0.0
        %1977 = vmatpush2.msra.mxu0 0.0
        %1978 = vmatprep.subr.mxu0 0.0
        %1979 = vmatpush2.msra.mxu0 0.0
        %1980 = vmatprep.subr.mxu0 0.0
        %1981 = vmatpush2.msra.mxu0 0.0
        %1982 = vmatprep.subr.mxu0 0.0
        %1983 = vmatpush2.msra.mxu0 0.0
        %1984 = vmatprep.subr.mxu0 0.0
        %1985 = vmatpush2.msra.mxu0 0.0
        %1986 = vmatprep.subr.mxu0 0.0
        %1987 = vmatpush2.msra.mxu0 0.0
        %1988 = vmatprep.subr.mxu0 0.0
        %1989 = vmatpush2.msra.mxu0 0.0
        %1990 = vmatprep.subr.mxu0 0.0
        %1991 = vmatpush2.msra.mxu0 0.0
        %1992 = vmatprep.subr.mxu0 0.0
        %1993 = vmatpush2.msra.mxu0 0.0
        %1994 = vmatprep.subr.mxu0 0.0
        %1995 = vmatpush2.msra.mxu0 0.0
        %1996 = vmatprep.subr.mxu0 0.0
        %1997 = vmatpush2.msra.mxu0 0.0
        %1998 = vmatprep.subr.mxu0 0.0
        %1999 = vmatpush2.msra.mxu0 0.0
        %2000 = vmatprep.subr.mxu0 0.0
        %2001 = vmatpush2.msra.mxu0 0.0
        %2002 = vmatprep.subr.mxu0 0.0
        %2003 = vmatpush2.msra.mxu0 0.0
        %2004 = vmatprep.subr.mxu0 0.0
        %2005 = vmatpush2.msra.mxu0 0.0
        %2006 = vmatprep.mubr.f32.mxu0 0.0
        %2007 = vmatmul.mubr.f32.gmra.mxu0 %v1940
        %v2008 = vpop.f32.mrf.mxu0
        %v2009 = vadd.f32 0.0, %v2008
        %v2010 = vpop.f32.mrf.mxu0
        %2011 = vdwg.mxu0
        %vm2012 = vcmask 516096
        %2013 = vst.msk [vmem:[%s417] sm:$0x1] %vm2012, %v2009
        %s2014 = sand.u32 %s292, 1
        %s2015 = scalar_lea.sflag [#allocation3], %s2014
        %s2016 = sand.u32 %s292, 1
        %s2017 = scalar_lea.vmem [#allocation5], %s2016
        // Predicated region
        $region73: #{forward.1} parent=67 // pred_check
          %p2018 = pneg %p302
        $region74: #{forward.1} parent=67 // pred_check_branch
          %2020 = sbr.rel (%p2018) target = $region76
        $region75: #{forward.1} parent=67 // pred_region
          %s2022 = ssub.s32 16, 16
          %2023 = vsyncadd %s2015, %s2022
          %s2024 = smul.addr %s27, 16
          %s2025 = scalar_lea.hbm %s12, %s2024
          %s2027 = sshll.u32 %s2017, 4
          %s2028 = int_to_ptr.vmem [resolvable:$true] %s2027
          %2030 = dma.vmem_to_hbm [thread:$0]  %s2028, 16, %s2025, %s2015
        $region76: #{forward.1} parent=67 // pred_fallthru
          _
      $region68: #{forward.1} parent=5 // pred_fallthru
        _
      %p2031 = scmp.le.s32.totalorder 2, %s22
      // Predicated region
      $region77: #{forward.1} parent=5 // pred_check
        %p2032 = pneg %p2031
      $region78: #{forward.1} parent=5 // pred_check_branch
        %2034 = sbr.rel (%p2032) target = $region80
      $region79: #{forward.1} parent=5 // pred_region
        %s2035 = ssub.s32 %s22, 2
        // Predicated region
        $region81: #{forward.1} parent=79 // pred_check
          %p2036 = pneg %p308
        $region82: #{forward.1} parent=79 // pred_check_branch
          %2038 = sbr.rel (%p2036) target = $region84
        $region83: #{forward.1} parent=79 // pred_region
          %s2039 = sand.u32 %s293, 1
          %s2040 = scalar_lea.sflag [#allocation3], %s2039
          %s2041 = sand.u32 %s293, 1
          %s2042 = scalar_lea.vmem [#allocation5], %s2041
          %2043 = dma.done %s2040, 16
        $region84: #{forward.1} parent=79 // pred_fallthru
          _
      $region80: #{forward.1} parent=5 // pred_fallthru
        _
    $region6: #{forward.1} parent=1 // loop_footer
      %s26 = sadd.s32 1, %s22
    $region7: #{forward.1} parent=1 // loop_footer_branch
      %21 = sbr.rel target = $region3
    $region8: #{forward.1} parent=1 // loop_exit
      _
    %2044 = vsyncpa [#allocation3], 1
    %s2045 = scalar_lea.sflag [#allocation3], 1
    %2046 = vsyncpa %s2045, 1
    %2047 = vsyncpa [#allocation4], 1
    %s2048 = scalar_lea.sflag [#allocation4], 1
    %2049 = vsyncpa %s2048, 1

</llo_original>
